<compile_context>
chip_gen: v7x
topology: tpu7x:2x2x1
jax: 0.10.0
libtpu: 0.0.40
codegen_flags: <defaults>
</compile_context>

<pallas_src>
import jax
import jax.numpy as jnp
from jax.experimental import pallas as pl
from jax.experimental.pallas import tpu as pltpu

C_IN = 64        # module input / output channels
C_MID = 112      # hidden channels
C_PAD = 128      # lane-dense padded channel width
KSIZE = 3


def _encoder_kernel(x_ref, w0_ref, w3_ref, w5_ref, b_ref, o_ref):
    # x_ref : (1, L, 128)    one batch element, NLC, channel-padded
    # w0_ref: (128, 128)     cc0 1x1 conv as (C_in_pad, C_out_pad)
    # w3_ref: (4, 384, 128)  cc1..cc4 im2col weights (K*C_in_pad, C_out_pad)
    # w5_ref: (128, 128)     cc5 1x1 conv
    # b_ref : (6, 1, 128)    biases for cc0, cc1..cc4, cc5 (zero-padded)
    # o_ref : (1, L, 128)
    x = x_ref[0]                                    # (L, 128) f32
    zrow = jnp.zeros((1, C_PAD), jnp.float32)

    def conv3_same_relu(r, w, b):
        # 'same' (pad=1) k=3 conv via im2col -> a single MXU matmul.
        rm1 = jnp.concatenate([zrow, r[:-1, :]], axis=0)   # row l = r[l-1], r[-1]=0
        rp1 = jnp.concatenate([r[1:, :], zrow], axis=0)    # row l = r[l+1], r[L]=0
        cols = jnp.concatenate([rm1, r, rp1], axis=1)      # (L, 3*128), k-major
        y = jnp.dot(cols, w, preferred_element_type=jnp.float32) + b
        return jnp.maximum(y, 0.0)

    # cc0: 1x1 conv, no activation
    r = jnp.dot(x, w0_ref[...], preferred_element_type=jnp.float32) + b_ref[0]

    # cc1..cc4 residual blocks: r = ReLU(conv3(r)) + r
    for i in range(4):
        r = conv3_same_relu(r, w3_ref[i], b_ref[i + 1]) + r

    # cc5: 1x1 conv, no activation; global residual with the (padded) input
    t = jnp.dot(r, w5_ref[...], preferred_element_type=jnp.float32) + b_ref[5]
    o_ref[0] = (t + x).astype(o_ref.dtype)


def encoder_ai85cnn_pallas(x_ncw, params):
    """x_ncw: (N, 64, L) float32; params: torch-layout conv weights/biases."""
    n, c_in, length = x_ncw.shape
    assert c_in == C_IN

    # ---- layout & padding glue (plain JAX, one pass each way) ----
    x_nlc = jnp.transpose(x_ncw, (0, 2, 1))                        # (N, L, 64)
    x_pad = jnp.pad(x_nlc, ((0, 0), (0, 0), (0, C_PAD - c_in)))    # (N, L, 128)

    def pad_1x1(w):  # (C_out, C_in, 1) -> (C_in_pad, C_out_pad)
        m = jnp.transpose(w[:, :, 0], (1, 0))
        return jnp.pad(m, ((0, C_PAD - m.shape[0]), (0, C_PAD - m.shape[1])))

    def pad_3x3(w):  # (C_out, C_in, 3) -> (3*C_in_pad, C_out_pad), k-major
        m = jnp.transpose(w, (2, 1, 0))                            # (K, C_in, C_out)
        m = jnp.pad(m, ((0, 0),
                        (0, C_PAD - m.shape[1]),
                        (0, C_PAD - m.shape[2])))
        return m.reshape(KSIZE * C_PAD, C_PAD)

    def pad_bias(b):  # (C_out,) -> (1, C_out_pad)
        return jnp.pad(b, (0, C_PAD - b.shape[0])).reshape(1, C_PAD)

    w0 = pad_1x1(params["w0"])
    w5 = pad_1x1(params["w5"])
    w3 = jnp.stack([pad_3x3(params[f"w{i}"]) for i in (1, 2, 3, 4)])  # (4, 384, 128)
    b_all = jnp.stack([pad_bias(params[f"b{i}"]) for i in range(6)])  # (6, 1, 128)

    out_nlc = pl.pallas_call(
        _encoder_kernel,
        out_shape=jax.ShapeDtypeStruct((n, length, C_PAD), x_ncw.dtype),
        grid=(n,),
        in_specs=[
            pl.BlockSpec((1, length, C_PAD), lambda b: (b, 0, 0)),
            pl.BlockSpec((C_PAD, C_PAD), lambda b: (0, 0)),
            pl.BlockSpec((4, KSIZE * C_PAD, C_PAD), lambda b: (0, 0, 0)),
            pl.BlockSpec((C_PAD, C_PAD), lambda b: (0, 0)),
            pl.BlockSpec((6, 1, C_PAD), lambda b: (0, 0, 0)),
        ],
        out_specs=pl.BlockSpec((1, length, C_PAD), lambda b: (b, 0, 0)),
        compiler_params=pltpu.CompilerParams(
            dimension_semantics=("parallel",),
        ),
    )(x_pad, w0, w3, w5, b_all)

    # Back to PyTorch NCW; slice off the channel padding.
    return jnp.transpose(out_nlc, (0, 2, 1))[:, :C_IN, :]


def encoder_reference(x, params):
    """Pure-JAX reference matching the torch module (float Conv1d + ReLU)."""
    def conv1d(x_ncw, w, b, pad):
        out = jax.lax.conv_general_dilated(
            x_ncw, w, window_strides=(1,), padding=[(pad, pad)],
            dimension_numbers=("NCH", "OIH", "NCH"))
        return out + b[None, :, None]

    r = conv1d(x, params["w0"], params["b0"], 0)
    for i in (1, 2, 3, 4):
        t = jnp.maximum(conv1d(r, params[f"w{i}"], params[f"b{i}"], 1), 0.0)
        r = t + r
    t = conv1d(r, params["w5"], params["b5"], 0)
    return t + x


if __name__ == "__main__":
    key = jax.random.PRNGKey(0)
    keys = jax.random.split(key, 13)

    N, L = 2, 16
    x = jax.random.normal(keys[0], (N, C_IN, L), dtype=jnp.float32)

    # Deterministic parameters in PyTorch Conv1d layout: (C_out, C_in, K).
    layer_specs = [
        ("0", C_IN, C_MID, 1),
        ("1", C_MID, C_MID, 3),
        ("2", C_MID, C_MID, 3),
        ("3", C_MID, C_MID, 3),
        ("4", C_MID, C_MID, 3),
        ("5", C_MID, C_IN, 1),
    ]
    params = {}
    ki = 1
    for name, cin, cout, k in layer_specs:
        bound = 1.0 / (cin * k) ** 0.5
        params[f"w{name}"] = jax.random.uniform(
            keys[ki], (cout, cin, k), jnp.float32, minval=-bound, maxval=bound)
        ki += 1
        params[f"b{name}"] = jax.random.uniform(
            keys[ki], (cout,), jnp.float32, minval=-bound, maxval=bound)
        ki += 1

    out = encoder_ai85cnn_pallas(x, params)
    out = jax.block_until_ready(out)

    ref = encoder_reference(x, params)
    assert out.shape == (N, C_IN, L), out.shape
    assert jnp.allclose(out, ref, atol=1e-3, rtol=1e-3), "mismatch vs reference"

    print("KERNEL_OK")
</pallas_src>

<mosaic_0001>
module attributes {stable_mosaic.version = 11 : i64} {
  func.func @_encoder_kernel(%arg0: i32, %arg1: memref<1x16x128xf32, #tpu.memory_space<vmem>>, %arg2: memref<128x128xf32, #tpu.memory_space<vmem>>, %arg3: memref<4x384x128xf32, #tpu.memory_space<vmem>>, %arg4: memref<128x128xf32, #tpu.memory_space<vmem>>, %arg5: memref<6x1x128xf32, #tpu.memory_space<vmem>>, %arg6: memref<1x16x128xf32, #tpu.memory_space<vmem>>) attributes {dimension_semantics = [#tpu.dimension_semantics<parallel>], iteration_bounds = array<i64: 2>, scalar_prefetch = 0 : i64, scratch_operands = 0 : i64, tpu.core_type = #tpu.core_type<tc>, window_params = [{transform_indices = @transform_0, window_bounds = array<i64: 1, 16, 128>}, {pipeline_mode = #tpu.pipeline_mode<synchronous>, transform_indices = @transform_1, window_bounds = array<i64: 128, 128>}, {pipeline_mode = #tpu.pipeline_mode<synchronous>, transform_indices = @transform_2, window_bounds = array<i64: 4, 384, 128>}, {pipeline_mode = #tpu.pipeline_mode<synchronous>, transform_indices = @transform_3, window_bounds = array<i64: 128, 128>}, {pipeline_mode = #tpu.pipeline_mode<synchronous>, transform_indices = @transform_4, window_bounds = array<i64: 6, 1, 128>}, {transform_indices = @transform_5, window_bounds = array<i64: 1, 16, 128>}]} {
    %c0 = arith.constant 0 : index
    %c0_0 = arith.constant 0 : index
    %c0_1 = arith.constant 0 : index
    %0 = vector.load %arg1[%c0, %c0_0, %c0_1] : memref<1x16x128xf32, #tpu.memory_space<vmem>>, vector<1x16x128xf32>
    %1 = vector.shape_cast %0 : vector<1x16x128xf32> to vector<16x128xf32>
    %cst = arith.constant 0.000000e+00 : f32
    %2 = vector.broadcast %cst : f32 to vector<1x128xf32>
    %c0_2 = arith.constant 0 : index
    %c0_3 = arith.constant 0 : index
    %3 = vector.load %arg2[%c0_2, %c0_3] : memref<128x128xf32, #tpu.memory_space<vmem>>, vector<128x128xf32>
    %cst_4 = arith.constant dense<0.000000e+00> : vector<16x128xf32>
    %4 = tpu.matmul %1, %3, %cst_4 {dimension_numbers = #tpu.dot_dimension_numbers<[1], [0], [0], [1], [0, 0, 1, 1], [], []>} : vector<16x128xf32>, vector<128x128xf32>, vector<16x128xf32> -> vector<16x128xf32>
    %c0_5 = arith.constant 0 : index
    %c0_6 = arith.constant 0 : index
    %c0_7 = arith.constant 0 : index
    %5 = vector.load %arg5[%c0_5, %c0_6, %c0_7] : memref<6x1x128xf32, #tpu.memory_space<vmem>>, vector<1x1x128xf32>
    %6 = vector.shape_cast %5 : vector<1x1x128xf32> to vector<1x128xf32>
    %7 = vector.broadcast %6 : vector<1x128xf32> to vector<16x128xf32>
    %8 = arith.addf %4, %7 : vector<16x128xf32>
    %c0_8 = arith.constant 0 : index
    %c0_9 = arith.constant 0 : index
    %c0_10 = arith.constant 0 : index
    %9 = vector.load %arg3[%c0_8, %c0_9, %c0_10] : memref<4x384x128xf32, #tpu.memory_space<vmem>>, vector<1x384x128xf32>
    %10 = vector.shape_cast %9 : vector<1x384x128xf32> to vector<384x128xf32>
    %c1 = arith.constant 1 : index
    %c0_11 = arith.constant 0 : index
    %c0_12 = arith.constant 0 : index
    %11 = vector.load %arg5[%c1, %c0_11, %c0_12] : memref<6x1x128xf32, #tpu.memory_space<vmem>>, vector<1x1x128xf32>
    %12 = vector.shape_cast %11 : vector<1x1x128xf32> to vector<1x128xf32>
    %13 = vector.extract_strided_slice %8 {offsets = [0, 0], sizes = [15, 128], strides = [1, 1]} : vector<16x128xf32> to vector<15x128xf32>
    %14 = tpu.concatenate %2, %13 in 0 : vector<1x128xf32>, vector<15x128xf32> -> vector<16x128xf32>
    %15 = vector.extract_strided_slice %8 {offsets = [1, 0], sizes = [15, 128], strides = [1, 1]} : vector<16x128xf32> to vector<15x128xf32>
    %16 = tpu.concatenate %15, %2 in 0 : vector<15x128xf32>, vector<1x128xf32> -> vector<16x128xf32>
    %17 = tpu.concatenate %14, %8, %16 in 1 : vector<16x128xf32>, vector<16x128xf32>, vector<16x128xf32> -> vector<16x384xf32>
    %cst_13 = arith.constant dense<0.000000e+00> : vector<16x128xf32>
    %18 = tpu.matmul %17, %10, %cst_13 {dimension_numbers = #tpu.dot_dimension_numbers<[1], [0], [0], [1], [0, 0, 1, 1], [], []>} : vector<16x384xf32>, vector<384x128xf32>, vector<16x128xf32> -> vector<16x128xf32>
    %19 = vector.broadcast %12 : vector<1x128xf32> to vector<16x128xf32>
    %20 = arith.addf %18, %19 : vector<16x128xf32>
    %cst_14 = arith.constant 0.000000e+00 : f32
    %21 = vector.broadcast %cst_14 : f32 to vector<16x128xf32>
    %22 = arith.maximumf %20, %21 : vector<16x128xf32>
    %23 = arith.addf %22, %8 : vector<16x128xf32>
    %c1_15 = arith.constant 1 : index
    %c0_16 = arith.constant 0 : index
    %c0_17 = arith.constant 0 : index
    %24 = vector.load %arg3[%c1_15, %c0_16, %c0_17] : memref<4x384x128xf32, #tpu.memory_space<vmem>>, vector<1x384x128xf32>
    %25 = vector.shape_cast %24 : vector<1x384x128xf32> to vector<384x128xf32>
    %c2 = arith.constant 2 : index
    %c0_18 = arith.constant 0 : index
    %c0_19 = arith.constant 0 : index
    %26 = vector.load %arg5[%c2, %c0_18, %c0_19] : memref<6x1x128xf32, #tpu.memory_space<vmem>>, vector<1x1x128xf32>
    %27 = vector.shape_cast %26 : vector<1x1x128xf32> to vector<1x128xf32>
    %28 = vector.extract_strided_slice %23 {offsets = [0, 0], sizes = [15, 128], strides = [1, 1]} : vector<16x128xf32> to vector<15x128xf32>
    %29 = tpu.concatenate %2, %28 in 0 : vector<1x128xf32>, vector<15x128xf32> -> vector<16x128xf32>
    %30 = vector.extract_strided_slice %23 {offsets = [1, 0], sizes = [15, 128], strides = [1, 1]} : vector<16x128xf32> to vector<15x128xf32>
    %31 = tpu.concatenate %30, %2 in 0 : vector<15x128xf32>, vector<1x128xf32> -> vector<16x128xf32>
    %32 = tpu.concatenate %29, %23, %31 in 1 : vector<16x128xf32>, vector<16x128xf32>, vector<16x128xf32> -> vector<16x384xf32>
    %cst_20 = arith.constant dense<0.000000e+00> : vector<16x128xf32>
    %33 = tpu.matmul %32, %25, %cst_20 {dimension_numbers = #tpu.dot_dimension_numbers<[1], [0], [0], [1], [0, 0, 1, 1], [], []>} : vector<16x384xf32>, vector<384x128xf32>, vector<16x128xf32> -> vector<16x128xf32>
    %34 = vector.broadcast %27 : vector<1x128xf32> to vector<16x128xf32>
    %35 = arith.addf %33, %34 : vector<16x128xf32>
    %cst_21 = arith.constant 0.000000e+00 : f32
    %36 = vector.broadcast %cst_21 : f32 to vector<16x128xf32>
    %37 = arith.maximumf %35, %36 : vector<16x128xf32>
    %38 = arith.addf %37, %23 : vector<16x128xf32>
    %c2_22 = arith.constant 2 : index
    %c0_23 = arith.constant 0 : index
    %c0_24 = arith.constant 0 : index
    %39 = vector.load %arg3[%c2_22, %c0_23, %c0_24] : memref<4x384x128xf32, #tpu.memory_space<vmem>>, vector<1x384x128xf32>
    %40 = vector.shape_cast %39 : vector<1x384x128xf32> to vector<384x128xf32>
    %c3 = arith.constant 3 : index
    %c0_25 = arith.constant 0 : index
    %c0_26 = arith.constant 0 : index
    %41 = vector.load %arg5[%c3, %c0_25, %c0_26] : memref<6x1x128xf32, #tpu.memory_space<vmem>>, vector<1x1x128xf32>
    %42 = vector.shape_cast %41 : vector<1x1x128xf32> to vector<1x128xf32>
    %43 = vector.extract_strided_slice %38 {offsets = [0, 0], sizes = [15, 128], strides = [1, 1]} : vector<16x128xf32> to vector<15x128xf32>
    %44 = tpu.concatenate %2, %43 in 0 : vector<1x128xf32>, vector<15x128xf32> -> vector<16x128xf32>
    %45 = vector.extract_strided_slice %38 {offsets = [1, 0], sizes = [15, 128], strides = [1, 1]} : vector<16x128xf32> to vector<15x128xf32>
    %46 = tpu.concatenate %45, %2 in 0 : vector<15x128xf32>, vector<1x128xf32> -> vector<16x128xf32>
    %47 = tpu.concatenate %44, %38, %46 in 1 : vector<16x128xf32>, vector<16x128xf32>, vector<16x128xf32> -> vector<16x384xf32>
    %cst_27 = arith.constant dense<0.000000e+00> : vector<16x128xf32>
    %48 = tpu.matmul %47, %40, %cst_27 {dimension_numbers = #tpu.dot_dimension_numbers<[1], [0], [0], [1], [0, 0, 1, 1], [], []>} : vector<16x384xf32>, vector<384x128xf32>, vector<16x128xf32> -> vector<16x128xf32>
    %49 = vector.broadcast %42 : vector<1x128xf32> to vector<16x128xf32>
    %50 = arith.addf %48, %49 : vector<16x128xf32>
    %cst_28 = arith.constant 0.000000e+00 : f32
    %51 = vector.broadcast %cst_28 : f32 to vector<16x128xf32>
    %52 = arith.maximumf %50, %51 : vector<16x128xf32>
    %53 = arith.addf %52, %38 : vector<16x128xf32>
    %c3_29 = arith.constant 3 : index
    %c0_30 = arith.constant 0 : index
    %c0_31 = arith.constant 0 : index
    %54 = vector.load %arg3[%c3_29, %c0_30, %c0_31] : memref<4x384x128xf32, #tpu.memory_space<vmem>>, vector<1x384x128xf32>
    %55 = vector.shape_cast %54 : vector<1x384x128xf32> to vector<384x128xf32>
    %c4 = arith.constant 4 : index
    %c0_32 = arith.constant 0 : index
    %c0_33 = arith.constant 0 : index
    %56 = vector.load %arg5[%c4, %c0_32, %c0_33] : memref<6x1x128xf32, #tpu.memory_space<vmem>>, vector<1x1x128xf32>
    %57 = vector.shape_cast %56 : vector<1x1x128xf32> to vector<1x128xf32>
    %58 = vector.extract_strided_slice %53 {offsets = [0, 0], sizes = [15, 128], strides = [1, 1]} : vector<16x128xf32> to vector<15x128xf32>
    %59 = tpu.concatenate %2, %58 in 0 : vector<1x128xf32>, vector<15x128xf32> -> vector<16x128xf32>
    %60 = vector.extract_strided_slice %53 {offsets = [1, 0], sizes = [15, 128], strides = [1, 1]} : vector<16x128xf32> to vector<15x128xf32>
    %61 = tpu.concatenate %60, %2 in 0 : vector<15x128xf32>, vector<1x128xf32> -> vector<16x128xf32>
    %62 = tpu.concatenate %59, %53, %61 in 1 : vector<16x128xf32>, vector<16x128xf32>, vector<16x128xf32> -> vector<16x384xf32>
    %cst_34 = arith.constant dense<0.000000e+00> : vector<16x128xf32>
    %63 = tpu.matmul %62, %55, %cst_34 {dimension_numbers = #tpu.dot_dimension_numbers<[1], [0], [0], [1], [0, 0, 1, 1], [], []>} : vector<16x384xf32>, vector<384x128xf32>, vector<16x128xf32> -> vector<16x128xf32>
    %64 = vector.broadcast %57 : vector<1x128xf32> to vector<16x128xf32>
    %65 = arith.addf %63, %64 : vector<16x128xf32>
    %cst_35 = arith.constant 0.000000e+00 : f32
    %66 = vector.broadcast %cst_35 : f32 to vector<16x128xf32>
    %67 = arith.maximumf %65, %66 : vector<16x128xf32>
    %68 = arith.addf %67, %53 : vector<16x128xf32>
    %c0_36 = arith.constant 0 : index
    %c0_37 = arith.constant 0 : index
    %69 = vector.load %arg4[%c0_36, %c0_37] : memref<128x128xf32, #tpu.memory_space<vmem>>, vector<128x128xf32>
    %cst_38 = arith.constant dense<0.000000e+00> : vector<16x128xf32>
    %70 = tpu.matmul %68, %69, %cst_38 {dimension_numbers = #tpu.dot_dimension_numbers<[1], [0], [0], [1], [0, 0, 1, 1], [], []>} : vector<16x128xf32>, vector<128x128xf32>, vector<16x128xf32> -> vector<16x128xf32>
    %c5 = arith.constant 5 : index
    %c0_39 = arith.constant 0 : index
    %c0_40 = arith.constant 0 : index
    %71 = vector.load %arg5[%c5, %c0_39, %c0_40] : memref<6x1x128xf32, #tpu.memory_space<vmem>>, vector<1x1x128xf32>
    %72 = vector.shape_cast %71 : vector<1x1x128xf32> to vector<1x128xf32>
    %73 = vector.broadcast %72 : vector<1x128xf32> to vector<16x128xf32>
    %74 = arith.addf %70, %73 : vector<16x128xf32>
    %75 = arith.addf %74, %1 : vector<16x128xf32>
    %c0_41 = arith.constant 0 : index
    %c0_42 = arith.constant 0 : index
    %c0_43 = arith.constant 0 : index
    %76 = vector.load %arg6[%c0_41, %c0_42, %c0_43] : memref<1x16x128xf32, #tpu.memory_space<vmem>>, vector<1x16x128xf32>
    %77 = vector.shape_cast %76 : vector<1x16x128xf32> to vector<16x128xf32>
    %78 = vector.shape_cast %75 : vector<16x128xf32> to vector<1x16x128xf32>
    tpu.vector_store %arg6[%c0_41, %c0_42, %c0_43], %78 {strides = array<i32>} : memref<1x16x128xf32, #tpu.memory_space<vmem>>, vector<1x16x128xf32>,
    return
  }
  func.func @transform_0(%arg0: i32) -> (i32, i32, i32) {
    %c0_i32 = arith.constant 0 : i32
    %c0_i32_0 = arith.constant 0 : i32
    %c0_i32_1 = arith.constant 0 : i32
    return %arg0, %c0_i32, %c0_i32_0 : i32, i32, i32
  }
  func.func @transform_1(%arg0: i32) -> (i32, i32) {
    %c0_i32 = arith.constant 0 : i32
    %c0_i32_0 = arith.constant 0 : i32
    %c0_i32_1 = arith.constant 0 : i32
    return %c0_i32, %c0_i32_0 : i32, i32
  }
  func.func @transform_2(%arg0: i32) -> (i32, i32, i32) {
    %c0_i32 = arith.constant 0 : i32
    %c0_i32_0 = arith.constant 0 : i32
    %c0_i32_1 = arith.constant 0 : i32
    %c0_i32_2 = arith.constant 0 : i32
    return %c0_i32, %c0_i32_0, %c0_i32_1 : i32, i32, i32
  }
  func.func @transform_3(%arg0: i32) -> (i32, i32) {
    %c0_i32 = arith.constant 0 : i32
    %c0_i32_0 = arith.constant 0 : i32
    %c0_i32_1 = arith.constant 0 : i32
    return %c0_i32, %c0_i32_0 : i32, i32
  }
  func.func @transform_4(%arg0: i32) -> (i32, i32, i32) {
    %c0_i32 = arith.constant 0 : i32
    %c0_i32_0 = arith.constant 0 : i32
    %c0_i32_1 = arith.constant 0 : i32
    %c0_i32_2 = arith.constant 0 : i32
    return %c0_i32, %c0_i32_0, %c0_i32_1 : i32, i32, i32
  }
  func.func @transform_5(%arg0: i32) -> (i32, i32, i32) {
    %c0_i32 = arith.constant 0 : i32
    %c0_i32_0 = arith.constant 0 : i32
    %c0_i32_1 = arith.constant 0 : i32
    return %arg0, %c0_i32, %c0_i32_0 : i32, i32, i32
  }
}

</mosaic_0001>

<llo_original>
// kernel: tpu_custom_call.1
$region0: #{tpu_custom_call.1}
  #allocation0 [shape = 'u32[]', space=smem, size = 0x4, offset = 0x4, fixed_abs, tag = 'smem constant byte address 0x4 - core index']
  #allocation1 [shape = 'u32[144,128]{1,0:T(1,128)}', space=vmem, size = 0x12000, scoped, tag = 'internal scratch']
  %s0 = inlined_call_operand.hbm [shape: f32[2,16,128], index: 0, kind: input, shape index: {}]
  %s1 = inlined_call_operand.hbm [shape: f32[128,128], index: 1, kind: input, shape index: {}]
  %s2 = inlined_call_operand.hbm [shape: f32[4,384,128], index: 2, kind: input, shape index: {}]
  %s3 = inlined_call_operand.hbm [shape: f32[128,128], index: 3, kind: input, shape index: {}]
  %s4 = inlined_call_operand.vmem [shape: f32[6,1,128], index: 4, kind: input, shape index: {}]
  %s5 = inlined_call_operand.hbm [shape: f32[2,16,128], index: 5, kind: output, shape index: {}]
  %s6 = sld [smem:[#allocation0]]
  $region69: #{tpu_custom_call.1} parent=0
    _
  %s8 = ssub.s32 1, %s6
  %s9 = scalar_select 0, %s8, %s6
  $region1: #{tpu_custom_call.1} parent=0
    #allocation2 [shape = 'u8[16384]{0}', space=vmem, size = 0x4000, scoped, tag = 'input window, operand 0']
    #allocation3 [shape = 's32[2]{0}', space=sflag, size = 0x8, scoped, tag = 'scoped memory for tpu_custom_call.1']
    #allocation4 [shape = 's32[2]{0}', space=sflag, size = 0x8, scoped, tag = 'scoped memory for tpu_custom_call.1']
    #allocation5 [shape = 'u8[65536]{0}', space=vmem, size = 0x10000, scoped, tag = 'input window, operand 1, single buffered']
    #allocation6 [shape = 's32[1]{0}', space=sflag, size = 0x4, scoped, tag = 'scoped memory for tpu_custom_call.1']
    #allocation7 [shape = 'u8[786432]{0}', space=vmem, size = 0xc0000, scoped, tag = 'input window, operand 2, single buffered']
    #allocation8 [shape = 'u8[65536]{0}', space=vmem, size = 0x10000, scoped, tag = 'input window, operand 3, single buffered']
    #allocation9 [shape = 's32[1]{0}', space=sflag, size = 0x4, scoped, tag = 'scoped memory for tpu_custom_call.1']
    #allocation10 [shape = 'u8[16384]{0}', space=vmem, size = 0x4000, scoped, tag = 'output window, operand 0']
    %10 = vsyncpa [#allocation3], 0
    %s11 = scalar_lea.sflag [#allocation3], 1
    %12 = vsyncpa %s11, 0
    %13 = vsyncpa [#allocation6], 0
    %14 = vsyncpa [#allocation9], 0
    %15 = vsyncpa [#allocation4], 0
    %s16 = scalar_lea.sflag [#allocation4], 1
    %17 = vsyncpa %s16, 0
    loop: start=0, step=1, limit=4
    $region2: #{tpu_custom_call.1} parent=1 // loop_pre_header
      _
    $region3: #{tpu_custom_call.1} parent=1 // loop_header
      %s19 = sphi 0, %s23
      %p20 = scmp.ge.s32.totalorder %s19, 4
      %s29 = sphi 0, %s31
      %s32 = sphi 0, %s29
      %s33 = sphi 0, %s32
      %s49 = sphi 0, %s33
      %s53 = sphi 0, %s53
      %s55 = sphi 0, %s53
      %s56 = sphi 0, %s55
      %s70 = sphi 0, %s56
      %s74 = sphi 0, %s74
      %s76 = sphi 0, %s74
      %s77 = sphi 0, %s76
      %s91 = sphi 0, %s77
      %s95 = sphi 0, %s95
      %s97 = sphi 0, %s95
      %s98 = sphi 0, %s97
      %s112 = sphi 0, %s98
      %s116 = sphi 0, %s116
      %s118 = sphi 0, %s116
      %s119 = sphi 0, %s118
      %s133 = sphi 0, %s119
      %s139 = sphi 0, %s141
      %s142 = sphi 0, %s139
      %s143 = sphi 0, %s142
      %s159 = sphi 0, %s143
    $region4: #{tpu_custom_call.1} parent=1 // loop_header_branch
      %22 = sbr.rel (%p20) target = $region8
    $region5: #{tpu_custom_call.1} parent=1 // loop_body
      %s24 = ssub.s32 %s19, 1
      %s25 = ssub.s32 %s19, 2
      %s26 = sadd.s32 %s19, 1
      %s27 = ssub.s32 %s19, %s26
      %p28 = scmp.eq.s32.totalorder %s27, 0
      %s30 = sadd.s32 %s29, 1
      %s31 = scalar_select %p28, %s29, %s30
      %p34 = pneg %p28
      %p35 = scmp.eq.s32.totalorder %s19, 1
      %p36 = por %p34, %p35
      %p37 = scmp.ne.s32.totalorder %s29, %s32
      %p38 = scmp.eq.s32.totalorder %s19, 0
      %p39 = por %p37, %p38
      %p40 = scmp.ne.s32.totalorder %s29, %s32
      %p41 = scmp.eq.s32.totalorder %s24, 1
      %p42 = por %p40, %p41
      %p43 = scmp.ne.s32.totalorder %s32, %s33
      %p44 = scmp.eq.s32.totalorder %s24, 0
      %p45 = por %p43, %p44
      %p46 = scmp.ne.s32.totalorder %s32, %s33
      %p47 = scmp.eq.s32.totalorder %s25, 1
      %p48 = por %p46, %p47
      %p50 = scmp.ne.s32.totalorder %s33, %s49
      %p51 = scmp.eq.s32.totalorder %s25, 0
      %p52 = por %p50, %p51
      %s54 = sadd.s32 %s53, 1
      %p57 = scmp.eq.s32.totalorder %s19, 1
      %p58 = scmp.ne.s32.totalorder %s53, %s55
      %p59 = scmp.eq.s32.totalorder %s19, 0
      %p60 = por %p58, %p59
      %p61 = scmp.ne.s32.totalorder %s53, %s55
      %p62 = scmp.eq.s32.totalorder %s24, 1
      %p63 = por %p61, %p62
      %p64 = scmp.ne.s32.totalorder %s55, %s56
      %p65 = scmp.eq.s32.totalorder %s24, 0
      %p66 = por %p64, %p65
      %p67 = scmp.ne.s32.totalorder %s55, %s56
      %p68 = scmp.eq.s32.totalorder %s25, 1
      %p69 = por %p67, %p68
      %p71 = scmp.ne.s32.totalorder %s56, %s70
      %p72 = scmp.eq.s32.totalorder %s25, 0
      %p73 = por %p71, %p72
      %s75 = sadd.s32 %s74, 1
      %p78 = scmp.eq.s32.totalorder %s19, 1
      %p79 = scmp.ne.s32.totalorder %s74, %s76
      %p80 = scmp.eq.s32.totalorder %s19, 0
      %p81 = por %p79, %p80
      %p82 = scmp.ne.s32.totalorder %s74, %s76
      %p83 = scmp.eq.s32.totalorder %s24, 1
      %p84 = por %p82, %p83
      %p85 = scmp.ne.s32.totalorder %s76, %s77
      %p86 = scmp.eq.s32.totalorder %s24, 0
      %p87 = por %p85, %p86
      %p88 = scmp.ne.s32.totalorder %s76, %s77
      %p89 = scmp.eq.s32.totalorder %s25, 1
      %p90 = por %p88, %p89
      %p92 = scmp.ne.s32.totalorder %s77, %s91
      %p93 = scmp.eq.s32.totalorder %s25, 0
      %p94 = por %p92, %p93
      %s96 = sadd.s32 %s95, 1
      %p99 = scmp.eq.s32.totalorder %s19, 1
      %p100 = scmp.ne.s32.totalorder %s95, %s97
      %p101 = scmp.eq.s32.totalorder %s19, 0
      %p102 = por %p100, %p101
      %p103 = scmp.ne.s32.totalorder %s95, %s97
      %p104 = scmp.eq.s32.totalorder %s24, 1
      %p105 = por %p103, %p104
      %p106 = scmp.ne.s32.totalorder %s97, %s98
      %p107 = scmp.eq.s32.totalorder %s24, 0
      %p108 = por %p106, %p107
      %p109 = scmp.ne.s32.totalorder %s97, %s98
      %p110 = scmp.eq.s32.totalorder %s25, 1
      %p111 = por %p109, %p110
      %p113 = scmp.ne.s32.totalorder %s98, %s112
      %p114 = scmp.eq.s32.totalorder %s25, 0
      %p115 = por %p113, %p114
      %s117 = sadd.s32 %s116, 1
      %p120 = scmp.eq.s32.totalorder %s19, 1
      %p121 = scmp.ne.s32.totalorder %s116, %s118
      %p122 = scmp.eq.s32.totalorder %s19, 0
      %p123 = por %p121, %p122
      %p124 = scmp.ne.s32.totalorder %s116, %s118
      %p125 = scmp.eq.s32.totalorder %s24, 1
      %p126 = por %p124, %p125
      %p127 = scmp.ne.s32.totalorder %s118, %s119
      %p128 = scmp.eq.s32.totalorder %s24, 0
      %p129 = por %p127, %p128
      %p130 = scmp.ne.s32.totalorder %s118, %s119
      %p131 = scmp.eq.s32.totalorder %s25, 1
      %p132 = por %p130, %p131
      %p134 = scmp.ne.s32.totalorder %s119, %s133
      %p135 = scmp.eq.s32.totalorder %s25, 0
      %p136 = por %p134, %p135
      %s137 = ssub.s32 %s19, %s26
      %p138 = scmp.eq.s32.totalorder %s137, 0
      %s140 = sadd.s32 %s139, 1
      %s141 = scalar_select %p138, %s139, %s140
      %p144 = pneg %p138
      %p145 = scmp.eq.s32.totalorder %s19, 1
      %p146 = por %p144, %p145
      %p147 = scmp.ne.s32.totalorder %s139, %s142
      %p148 = scmp.eq.s32.totalorder %s19, 0
      %p149 = por %p147, %p148
      %p150 = scmp.ne.s32.totalorder %s139, %s142
      %p151 = scmp.eq.s32.totalorder %s24, 1
      %p152 = por %p150, %p151
      %p153 = scmp.ne.s32.totalorder %s142, %s143
      %p154 = scmp.eq.s32.totalorder %s24, 0
      %p155 = por %p153, %p154
      %p156 = scmp.ne.s32.totalorder %s142, %s143
      %p157 = scmp.eq.s32.totalorder %s25, 1
      %p158 = por %p156, %p157
      %p160 = scmp.ne.s32.totalorder %s143, %s159
      %p161 = scmp.eq.s32.totalorder %s25, 0
      %p162 = por %p160, %p161
      %p163 = scmp.le.s32.totalorder 1, %s19
      %p164 = scmp.lt.s32.totalorder %s19, 3
      %p165 = pnand %p163, %p164
      %p166 = pneg %p165
      // Predicated region
      $region9: #{tpu_custom_call.1} parent=5 // pred_check
        _
      $region10: #{tpu_custom_call.1} parent=5 // pred_check_branch
        %168 = sbr.rel (%p165) target = $region12
      $region11: #{tpu_custom_call.1} parent=5 // pred_region
        %s169 = ssub.s32 %s19, 1
        // Predicated region
        $region13: #{tpu_custom_call.1} parent=11 // pred_check
          %p170 = pneg %p66
        $region14: #{tpu_custom_call.1} parent=11 // pred_check_branch
          %172 = sbr.rel (%p170) target = $region16
        $region15: #{tpu_custom_call.1} parent=11 // pred_region
          %s174 = ssub.s32 2048, 2048
          %175 = vsyncadd [#allocation6], %s174
          %s176 = sshll.u32 [#allocation5], 4
          %s177 = int_to_ptr.vmem [resolvable:$true] %s176
          %182 = dma.hbm_to_vmem [thread:$0]  %s1, 2048, %s177, [#allocation6], 128, 128, 8
        $region16: #{tpu_custom_call.1} parent=11 // pred_fallthru
          _
        // Predicated region
        $region17: #{tpu_custom_call.1} parent=11 // pred_check
          %p183 = pneg %p87
        $region18: #{tpu_custom_call.1} parent=11 // pred_check_branch
          %185 = sbr.rel (%p183) target = $region20
        $region19: #{tpu_custom_call.1} parent=11 // pred_region
          %s187 = ssub.s32 24576, 24576
          %188 = vsyncadd [#allocation6], %s187
          %s189 = sshll.u32 [#allocation7], 4
          %s190 = int_to_ptr.vmem [resolvable:$true] %s189
          %195 = dma.hbm_to_vmem [thread:$0]  %s2, 24576, %s190, [#allocation6], 128, 128, 8
        $region20: #{tpu_custom_call.1} parent=11 // pred_fallthru
          _
        // Predicated region
        $region21: #{tpu_custom_call.1} parent=11 // pred_check
          %p196 = pneg %p108
        $region22: #{tpu_custom_call.1} parent=11 // pred_check_branch
          %198 = sbr.rel (%p196) target = $region24
        $region23: #{tpu_custom_call.1} parent=11 // pred_region
          %s200 = ssub.s32 2048, 2048
          %201 = vsyncadd [#allocation9], %s200
          %s202 = sshll.u32 [#allocation8], 4
          %s203 = int_to_ptr.vmem [resolvable:$true] %s202
          %208 = dma.hbm_to_vmem [thread:$0]  %s3, 2048, %s203, [#allocation9], 128, 128, 8
        $region24: #{tpu_custom_call.1} parent=11 // pred_fallthru
          _
        // Predicated region
        $region25: #{tpu_custom_call.1} parent=11 // pred_check
          %p209 = pneg %p129
        $region26: #{tpu_custom_call.1} parent=11 // pred_check_branch
          %211 = sbr.rel (%p209) target = $region28
        $region27: #{tpu_custom_call.1} parent=11 // pred_region
          _
        $region28: #{tpu_custom_call.1} parent=11 // pred_fallthru
          _
      $region12: #{tpu_custom_call.1} parent=5 // pred_fallthru
        _
      %p212 = scmp.lt.s32.totalorder %s19, 2
      // Predicated region
      $region29: #{tpu_custom_call.1} parent=5 // pred_check
        %p213 = pneg %p212
      $region30: #{tpu_custom_call.1} parent=5 // pred_check_branch
        %215 = sbr.rel (%p213) target = $region32
      $region31: #{tpu_custom_call.1} parent=5 // pred_region
        // Predicated region
        $region33: #{tpu_custom_call.1} parent=31 // pred_check
          %p216 = pneg %p39
        $region34: #{tpu_custom_call.1} parent=31 // pred_check_branch
          %218 = sbr.rel (%p216) target = $region36
        $region35: #{tpu_custom_call.1} parent=31 // pred_region
          %s219 = sand.u32 %s29, 1
          %s220 = scalar_lea.sflag [#allocation3], %s219
          %s221 = sand.u32 %s29, 1
          %s222 = smul.addr %s221, 16
          %s223 = scalar_lea.vmem [#allocation2], %s222
          %s225 = ssub.s32 256, 256
          %226 = vsyncadd %s220, %s225
          %s227 = smul.addr %s19, 2
          %s228 = smul.addr %s227, 128
          %s229 = scalar_lea.hbm %s0, %s228
          %s230 = sshll.u32 %s223, 4
          %s231 = int_to_ptr.vmem [resolvable:$true] %s230
          %236 = dma.hbm_to_vmem [thread:$0]  %s229, 256, %s231, %s220, 128, 128, 8
        $region36: #{tpu_custom_call.1} parent=31 // pred_fallthru
          _
      $region32: #{tpu_custom_call.1} parent=5 // pred_fallthru
        _
      %p237 = scmp.le.s32.totalorder 1, %s19
      %p238 = scmp.lt.s32.totalorder %s19, 3
      %p239 = pnand %p237, %p238
      %p240 = pneg %p239
      // Predicated region
      $region37: #{tpu_custom_call.1} parent=5 // pred_check
        _
      $region38: #{tpu_custom_call.1} parent=5 // pred_check_branch
        %242 = sbr.rel (%p239) target = $region40
      $region39: #{tpu_custom_call.1} parent=5 // pred_region
        %s243 = ssub.s32 %s19, 1
        %s244 = sand.u32 %s32, 1
        %s245 = scalar_lea.sflag [#allocation3], %s244
        %s246 = sand.u32 %s32, 1
        %s247 = smul.addr %s246, 16
        %s248 = scalar_lea.vmem [#allocation2], %s247
        // Predicated region
        $region41: #{tpu_custom_call.1} parent=39 // pred_check
          %p249 = pneg %p45
        $region42: #{tpu_custom_call.1} parent=39 // pred_check_branch
          %251 = sbr.rel (%p249) target = $region44
        $region43: #{tpu_custom_call.1} parent=39 // pred_region
          %252 = dma.done %s245, 256
        $region44: #{tpu_custom_call.1} parent=39 // pred_fallthru
          _
        // Predicated region
        $region45: #{tpu_custom_call.1} parent=39 // pred_check
          %p253 = pneg %p66
        $region46: #{tpu_custom_call.1} parent=39 // pred_check_branch
          %255 = sbr.rel (%p253) target = $region48
        $region47: #{tpu_custom_call.1} parent=39 // pred_region
          %256 = dma.done [#allocation6], 2048
        $region48: #{tpu_custom_call.1} parent=39 // pred_fallthru
          _
        // Predicated region
        $region49: #{tpu_custom_call.1} parent=39 // pred_check
          %p257 = pneg %p87
        $region50: #{tpu_custom_call.1} parent=39 // pred_check_branch
          %259 = sbr.rel (%p257) target = $region52
        $region51: #{tpu_custom_call.1} parent=39 // pred_region
          %260 = dma.done [#allocation6], 24576
        $region52: #{tpu_custom_call.1} parent=39 // pred_fallthru
          _
        // Predicated region
        $region53: #{tpu_custom_call.1} parent=39 // pred_check
          %p261 = pneg %p108
        $region54: #{tpu_custom_call.1} parent=39 // pred_check_branch
          %263 = sbr.rel (%p261) target = $region56
        $region55: #{tpu_custom_call.1} parent=39 // pred_region
          %264 = dma.done [#allocation9], 2048
        $region56: #{tpu_custom_call.1} parent=39 // pred_fallthru
          _
        %s265 = sand.u32 %s32, 1
        %s266 = scalar_lea.sflag [#allocation3], %s265
        %s267 = sand.u32 %s32, 1
        %s268 = smul.addr %s267, 16
        %s269 = scalar_lea.vmem [#allocation2], %s268
        %p270 = pneg %p45
        %p271 = pneg %p42
        %p272 = pneg %p66
        %p273 = pneg %p63
        %p274 = pneg %p87
        %p275 = pneg %p84
        %p276 = pneg %p108
        %p277 = pneg %p105
        %p278 = pneg %p129
        %p279 = pneg %p126
        %p280 = pneg %p155
        %p281 = pneg %p152
        %s282 = sand.u32 %s142, 1
        %s283 = scalar_lea.sflag [#allocation4], %s282
        %s284 = sand.u32 %s142, 1
        %s285 = smul.addr %s284, 16
        %s286 = scalar_lea.vmem [#allocation10], %s285
        %v287 = vld [vmem:[%s248] sm:$0xff]
        %v288 = vld [vmem:[%s248 + $0x8] sm:$0xff]
        %v289 = vld [vmem:[#allocation5] sm:$0xff]
        %v290 = vld [vmem:[#allocation5 + $0x8] sm:$0xff]
        %v291 = vld [vmem:[#allocation5 + $0x10] sm:$0xff]
        %v292 = vld [vmem:[#allocation5 + $0x18] sm:$0xff]
        %v293 = vld [vmem:[#allocation5 + $0x20] sm:$0xff]
        %v294 = vld [vmem:[#allocation5 + $0x28] sm:$0xff]
        %v295 = vld [vmem:[#allocation5 + $0x30] sm:$0xff]
        %v296 = vld [vmem:[#allocation5 + $0x38] sm:$0xff]
        %v297 = vld [vmem:[#allocation5 + $0x40] sm:$0xff]
        %v298 = vld [vmem:[#allocation5 + $0x48] sm:$0xff]
        %v299 = vld [vmem:[#allocation5 + $0x50] sm:$0xff]
        %v300 = vld [vmem:[#allocation5 + $0x58] sm:$0xff]
        %v301 = vld [vmem:[#allocation5 + $0x60] sm:$0xff]
        %v302 = vld [vmem:[#allocation5 + $0x68] sm:$0xff]
        %v303 = vld [vmem:[#allocation5 + $0x70] sm:$0xff]
        %v304 = vld [vmem:[#allocation5 + $0x78] sm:$0xff]
        %v305 = vld [vmem:[%s4] sm:$0x1]
        %v307 = vlaneseq
        %v308 = vshrl.u32 %v307, 7
        %v309 = vsub.s32 0, %v308
        %v310 = vrot.slane %v305, %v309
        %312 = vmatprep.subr.mxu0 0.0
        %313 = vmatpush1.msra.mxu0 %v289
        %314 = vmatprep.subr.mxu0 0.0
        %315 = vmatpush1.msra.mxu0 %v290
        %316 = vmatprep.subr.mxu0 0.0
        %317 = vmatpush1.msra.mxu0 %v291
        %318 = vmatprep.subr.mxu0 0.0
        %319 = vmatpush1.msra.mxu0 %v292
        %320 = vmatprep.subr.mxu0 0.0
        %321 = vmatpush1.msra.mxu0 %v293
        %322 = vmatprep.subr.mxu0 0.0
        %323 = vmatpush1.msra.mxu0 %v294
        %324 = vmatprep.subr.mxu0 0.0
        %325 = vmatpush1.msra.mxu0 %v295
        %326 = vmatprep.subr.mxu0 0.0
        %327 = vmatpush1.msra.mxu0 %v296
        %328 = vmatprep.subr.mxu0 0.0
        %329 = vmatpush1.msra.mxu0 %v297
        %330 = vmatprep.subr.mxu0 0.0
        %331 = vmatpush1.msra.mxu0 %v298
        %332 = vmatprep.subr.mxu0 0.0
        %333 = vmatpush1.msra.mxu0 %v299
        %334 = vmatprep.subr.mxu0 0.0
        %335 = vmatpush1.msra.mxu0 %v300
        %336 = vmatprep.subr.mxu0 0.0
        %337 = vmatpush1.msra.mxu0 %v301
        %338 = vmatprep.subr.mxu0 0.0
        %339 = vmatpush1.msra.mxu0 %v302
        %340 = vmatprep.subr.mxu0 0.0
        %341 = vmatpush1.msra.mxu0 %v303
        %342 = vmatprep.subr.mxu0 0.0
        %343 = vmatpush1.msra.mxu0 %v304
        %344 = vmatprep.subr.mxu0 0.0
        %345 = vmatpush1.msra.mxu0 0.0
        %346 = vmatprep.subr.mxu0 0.0
        %347 = vmatpush1.msra.mxu0 0.0
        %348 = vmatprep.subr.mxu0 0.0
        %349 = vmatpush1.msra.mxu0 0.0
        %350 = vmatprep.subr.mxu0 0.0
        %351 = vmatpush1.msra.mxu0 0.0
        %352 = vmatprep.subr.mxu0 0.0
        %353 = vmatpush1.msra.mxu0 0.0
        %354 = vmatprep.subr.mxu0 0.0
        %355 = vmatpush1.msra.mxu0 0.0
        %356 = vmatprep.subr.mxu0 0.0
        %357 = vmatpush1.msra.mxu0 0.0
        %358 = vmatprep.subr.mxu0 0.0
        %359 = vmatpush1.msra.mxu0 0.0
        %360 = vmatprep.subr.mxu0 0.0
        %361 = vmatpush1.msra.mxu0 0.0
        %362 = vmatprep.subr.mxu0 0.0
        %363 = vmatpush1.msra.mxu0 0.0
        %364 = vmatprep.subr.mxu0 0.0
        %365 = vmatpush1.msra.mxu0 0.0
        %366 = vmatprep.subr.mxu0 0.0
        %367 = vmatpush1.msra.mxu0 0.0
        %368 = vmatprep.subr.mxu0 0.0
        %369 = vmatpush1.msra.mxu0 0.0
        %370 = vmatprep.subr.mxu0 0.0
        %371 = vmatpush1.msra.mxu0 0.0
        %372 = vmatprep.subr.mxu0 0.0
        %373 = vmatpush1.msra.mxu0 0.0
        %374 = vmatprep.subr.mxu0 0.0
        %375 = vmatpush1.msra.mxu0 0.0
        %376 = vmatprep.mubr.f32.mxu0 0.0
        %377 = vmatmul.mubr.f32.gmra.mrb[0].mxu0 %v287
        %v378 = vpop.f32.mrb[0].mxu0
        %v379 = vadd.f32 %v310, %v378
        %v380 = vpop.f32.mrb[0].mxu0
        %381 = vmatprep.mubr.f32.mxu0 0.0
        %382 = vmatmul.mubr.f32.gmra.mrb[0].mxu0 %v288
        %v383 = vpop.f32.mrb[0].mxu0
        %v384 = vadd.f32 %v310, %v383
        %v385 = vpop.f32.mrb[0].mxu0
        %386 = vdwg.mxu0
        %v387 = vld [vmem:[#allocation7] sm:$0xff]
        %v388 = vld [vmem:[#allocation7 + $0x8] sm:$0xff]
        %v389 = vld [vmem:[#allocation7 + $0x10] sm:$0xff]
        %v390 = vld [vmem:[#allocation7 + $0x18] sm:$0xff]
        %v391 = vld [vmem:[#allocation7 + $0x20] sm:$0xff]
        %v392 = vld [vmem:[#allocation7 + $0x28] sm:$0xff]
        %v393 = vld [vmem:[#allocation7 + $0x30] sm:$0xff]
        %v394 = vld [vmem:[#allocation7 + $0x38] sm:$0xff]
        %v395 = vld [vmem:[#allocation7 + $0x40] sm:$0xff]
        %v396 = vld [vmem:[#allocation7 + $0x48] sm:$0xff]
        %v397 = vld [vmem:[#allocation7 + $0x50] sm:$0xff]
        %v398 = vld [vmem:[#allocation7 + $0x58] sm:$0xff]
        %v399 = vld [vmem:[#allocation7 + $0x60] sm:$0xff]
        %v400 = vld [vmem:[#allocation7 + $0x68] sm:$0xff]
        %v401 = vld [vmem:[#allocation7 + $0x70] sm:$0xff]
        %v402 = vld [vmem:[#allocation7 + $0x78] sm:$0xff]
        %v403 = vld [vmem:[#allocation7 + $0x80] sm:$0xff]
        %v404 = vld [vmem:[#allocation7 + $0x88] sm:$0xff]
        %v405 = vld [vmem:[#allocation7 + $0x90] sm:$0xff]
        %v406 = vld [vmem:[#allocation7 + $0x98] sm:$0xff]
        %v407 = vld [vmem:[#allocation7 + $0xa0] sm:$0xff]
        %v408 = vld [vmem:[#allocation7 + $0xa8] sm:$0xff]
        %v409 = vld [vmem:[#allocation7 + $0xb0] sm:$0xff]
        %v410 = vld [vmem:[#allocation7 + $0xb8] sm:$0xff]
        %v411 = vld [vmem:[#allocation7 + $0xc0] sm:$0xff]
        %v412 = vld [vmem:[#allocation7 + $0xc8] sm:$0xff]
        %v413 = vld [vmem:[#allocation7 + $0xd0] sm:$0xff]
        %v414 = vld [vmem:[#allocation7 + $0xd8] sm:$0xff]
        %v415 = vld [vmem:[#allocation7 + $0xe0] sm:$0xff]
        %v416 = vld [vmem:[#allocation7 + $0xe8] sm:$0xff]
        %v417 = vld [vmem:[#allocation7 + $0xf0] sm:$0xff]
        %v418 = vld [vmem:[#allocation7 + $0xf8] sm:$0xff]
        %v419 = vld [vmem:[#allocation7 + $0x100] sm:$0xff]
        %v420 = vld [vmem:[#allocation7 + $0x108] sm:$0xff]
        %v421 = vld [vmem:[#allocation7 + $0x110] sm:$0xff]
        %v422 = vld [vmem:[#allocation7 + $0x118] sm:$0xff]
        %v423 = vld [vmem:[#allocation7 + $0x120] sm:$0xff]
        %v424 = vld [vmem:[#allocation7 + $0x128] sm:$0xff]
        %v425 = vld [vmem:[#allocation7 + $0x130] sm:$0xff]
        %v426 = vld [vmem:[#allocation7 + $0x138] sm:$0xff]
        %v427 = vld [vmem:[#allocation7 + $0x140] sm:$0xff]
        %v428 = vld [vmem:[#allocation7 + $0x148] sm:$0xff]
        %v429 = vld [vmem:[#allocation7 + $0x150] sm:$0xff]
        %v430 = vld [vmem:[#allocation7 + $0x158] sm:$0xff]
        %v431 = vld [vmem:[#allocation7 + $0x160] sm:$0xff]
        %v432 = vld [vmem:[#allocation7 + $0x168] sm:$0xff]
        %v433 = vld [vmem:[#allocation7 + $0x170] sm:$0xff]
        %v434 = vld [vmem:[#allocation7 + $0x178] sm:$0xff]
        %s435 = scalar_lea.vmem %s4, 1
        %v436 = vld [vmem:[%s435] sm:$0x1]
        %vm439 = vcmask 1040384
        %v440 = vrot.slane %v379, 7
        %v441 = vrot.slane %v384, 7
        %v442 = vsel %vm439, %v440, %v441
        %v445 = vsel %vm439, 0.0, %v440
        %vm446 = vcmask 1046528
        %v447 = vrot.slane %v379, 1
        %v448 = vrot.slane %v384, 1
        %v449 = vsel %vm446, %v447, %v448
        %v452 = vsel %vm446, %v448, 0.0
        %v454 = vlaneseq
        %v455 = vshrl.u32 %v454, 7
        %v456 = vsub.s32 0, %v455
        %v457 = vrot.slane %v436, %v456
        %459 = vmatprep.subr.mxu0 0.0
        %460 = vmatpush1.msra.mxu0 %v387
        %461 = vmatprep.subr.mxu0 0.0
        %462 = vmatpush1.msra.mxu0 %v388
        %463 = vmatprep.subr.mxu0 0.0
        %464 = vmatpush1.msra.mxu0 %v389
        %465 = vmatprep.subr.mxu0 0.0
        %466 = vmatpush1.msra.mxu0 %v390
        %467 = vmatprep.subr.mxu0 0.0
        %468 = vmatpush1.msra.mxu0 %v391
        %469 = vmatprep.subr.mxu0 0.0
        %470 = vmatpush1.msra.mxu0 %v392
        %471 = vmatprep.subr.mxu0 0.0
        %472 = vmatpush1.msra.mxu0 %v393
        %473 = vmatprep.subr.mxu0 0.0
        %474 = vmatpush1.msra.mxu0 %v394
        %475 = vmatprep.subr.mxu0 0.0
        %476 = vmatpush1.msra.mxu0 %v395
        %477 = vmatprep.subr.mxu0 0.0
        %478 = vmatpush1.msra.mxu0 %v396
        %479 = vmatprep.subr.mxu0 0.0
        %480 = vmatpush1.msra.mxu0 %v397
        %481 = vmatprep.subr.mxu0 0.0
        %482 = vmatpush1.msra.mxu0 %v398
        %483 = vmatprep.subr.mxu0 0.0
        %484 = vmatpush1.msra.mxu0 %v399
        %485 = vmatprep.subr.mxu0 0.0
        %486 = vmatpush1.msra.mxu0 %v400
        %487 = vmatprep.subr.mxu0 0.0
        %488 = vmatpush1.msra.mxu0 %v401
        %489 = vmatprep.subr.mxu0 0.0
        %490 = vmatpush1.msra.mxu0 %v402
        %491 = vmatprep.subr.mxu0 0.0
        %492 = vmatpush1.msra.mxu0 %v403
        %493 = vmatprep.subr.mxu0 0.0
        %494 = vmatpush1.msra.mxu0 %v404
        %495 = vmatprep.subr.mxu0 0.0
        %496 = vmatpush1.msra.mxu0 %v405
        %497 = vmatprep.subr.mxu0 0.0
        %498 = vmatpush1.msra.mxu0 %v406
        %499 = vmatprep.subr.mxu0 0.0
        %500 = vmatpush1.msra.mxu0 %v407
        %501 = vmatprep.subr.mxu0 0.0
        %502 = vmatpush1.msra.mxu0 %v408
        %503 = vmatprep.subr.mxu0 0.0
        %504 = vmatpush1.msra.mxu0 %v409
        %505 = vmatprep.subr.mxu0 0.0
        %506 = vmatpush1.msra.mxu0 %v410
        %507 = vmatprep.subr.mxu0 0.0
        %508 = vmatpush1.msra.mxu0 %v411
        %509 = vmatprep.subr.mxu0 0.0
        %510 = vmatpush1.msra.mxu0 %v412
        %511 = vmatprep.subr.mxu0 0.0
        %512 = vmatpush1.msra.mxu0 %v413
        %513 = vmatprep.subr.mxu0 0.0
        %514 = vmatpush1.msra.mxu0 %v414
        %515 = vmatprep.subr.mxu0 0.0
        %516 = vmatpush1.msra.mxu0 %v415
        %517 = vmatprep.subr.mxu0 0.0
        %518 = vmatpush1.msra.mxu0 %v416
        %519 = vmatprep.subr.mxu0 0.0
        %520 = vmatpush1.msra.mxu0 %v417
        %521 = vmatprep.subr.mxu0 0.0
        %522 = vmatpush1.msra.mxu0 %v418
        %523 = vmatprep.mubr.f32.mxu0 %v379
        %524 = vmatmul.mubr.f32.gmra.mrb[0].mxu0 %v445
        %v525 = vpop.f32.mrb[0].mxu0
        %v526 = vadd.f32 %v457, %v525
        %v527 = vpop.f32.mrb[0].mxu0
        %528 = vmatprep.mubr.f32.mxu0 %v384
        %529 = vmatmul.mubr.f32.gmra.mrb[0].mxu0 %v442
        %v530 = vpop.f32.mrb[0].mxu0
        %v531 = vadd.f32 %v457, %v530
        %v532 = vpop.f32.mrb[0].mxu0
        %533 = vdwg.mxu0
        %534 = vmatprep.subr.mxu0 0.0
        %535 = vmatpush1.msra.mxu0 %v419
        %536 = vmatprep.subr.mxu0 0.0
        %537 = vmatpush1.msra.mxu0 %v420
        %538 = vmatprep.subr.mxu0 0.0
        %539 = vmatpush1.msra.mxu0 %v421
        %540 = vmatprep.subr.mxu0 0.0
        %541 = vmatpush1.msra.mxu0 %v422
        %542 = vmatprep.subr.mxu0 0.0
        %543 = vmatpush1.msra.mxu0 %v423
        %544 = vmatprep.subr.mxu0 0.0
        %545 = vmatpush1.msra.mxu0 %v424
        %546 = vmatprep.subr.mxu0 0.0
        %547 = vmatpush1.msra.mxu0 %v425
        %548 = vmatprep.subr.mxu0 0.0
        %549 = vmatpush1.msra.mxu0 %v426
        %550 = vmatprep.subr.mxu0 0.0
        %551 = vmatpush1.msra.mxu0 %v427
        %552 = vmatprep.subr.mxu0 0.0
        %553 = vmatpush1.msra.mxu0 %v428
        %554 = vmatprep.subr.mxu0 0.0
        %555 = vmatpush1.msra.mxu0 %v429
        %556 = vmatprep.subr.mxu0 0.0
        %557 = vmatpush1.msra.mxu0 %v430
        %558 = vmatprep.subr.mxu0 0.0
        %559 = vmatpush1.msra.mxu0 %v431
        %560 = vmatprep.subr.mxu0 0.0
        %561 = vmatpush1.msra.mxu0 %v432
        %562 = vmatprep.subr.mxu0 0.0
        %563 = vmatpush1.msra.mxu0 %v433
        %564 = vmatprep.subr.mxu0 0.0
        %565 = vmatpush1.msra.mxu0 %v434
        %566 = vmatprep.subr.mxu0 0.0
        %567 = vmatpush1.msra.mxu0 0.0
        %568 = vmatprep.subr.mxu0 0.0
        %569 = vmatpush1.msra.mxu0 0.0
        %570 = vmatprep.subr.mxu0 0.0
        %571 = vmatpush1.msra.mxu0 0.0
        %572 = vmatprep.subr.mxu0 0.0
        %573 = vmatpush1.msra.mxu0 0.0
        %574 = vmatprep.subr.mxu0 0.0
        %575 = vmatpush1.msra.mxu0 0.0
        %576 = vmatprep.subr.mxu0 0.0
        %577 = vmatpush1.msra.mxu0 0.0
        %578 = vmatprep.subr.mxu0 0.0
        %579 = vmatpush1.msra.mxu0 0.0
        %580 = vmatprep.subr.mxu0 0.0
        %581 = vmatpush1.msra.mxu0 0.0
        %582 = vmatprep.subr.mxu0 0.0
        %583 = vmatpush1.msra.mxu0 0.0
        %584 = vmatprep.subr.mxu0 0.0
        %585 = vmatpush1.msra.mxu0 0.0
        %586 = vmatprep.subr.mxu0 0.0
        %587 = vmatpush1.msra.mxu0 0.0
        %588 = vmatprep.subr.mxu0 0.0
        %589 = vmatpush1.msra.mxu0 0.0
        %590 = vmatprep.subr.mxu0 0.0
        %591 = vmatpush1.msra.mxu0 0.0
        %592 = vmatprep.subr.mxu0 0.0
        %593 = vmatpush1.msra.mxu0 0.0
        %594 = vmatprep.subr.mxu0 0.0
        %595 = vmatpush1.msra.mxu0 0.0
        %596 = vmatprep.subr.mxu0 0.0
        %597 = vmatpush1.msra.mxu0 0.0
        %598 = vmatprep.mubr.f32.mxu0 0.0
        %599 = vmatmul.mubr.f32.gmra.mrb[0].mxu0 %v449
        %v600 = vpop.f32.mrb[0].mxu0
        %v601 = vadd.f32 %v526, %v600
        %v602 = vpop.f32.mrb[0].mxu0
        %603 = vmatprep.mubr.f32.mxu0 0.0
        %604 = vmatmul.mubr.f32.gmra.mrb[0].mxu0 %v452
        %v605 = vpop.f32.mrb[0].mxu0
        %v606 = vadd.f32 %v531, %v605
        %v607 = vpop.f32.mrb[0].mxu0
        %608 = vdwg.mxu0
        %v609 = vmax.f32 %v601, 0.0
        %v610 = vmax.f32 %v606, 0.0
        %v611 = vadd.f32 %v609, %v379
        %v612 = vadd.f32 %v610, %v384
        %s613 = scalar_lea.vmem [#allocation7], 384
        %v614 = vld [vmem:[%s613] sm:$0xff]
        %v615 = vld [vmem:[%s613 + $0x8] sm:$0xff]
        %v616 = vld [vmem:[%s613 + $0x10] sm:$0xff]
        %v617 = vld [vmem:[%s613 + $0x18] sm:$0xff]
        %v618 = vld [vmem:[%s613 + $0x20] sm:$0xff]
        %v619 = vld [vmem:[%s613 + $0x28] sm:$0xff]
        %v620 = vld [vmem:[%s613 + $0x30] sm:$0xff]
        %v621 = vld [vmem:[%s613 + $0x38] sm:$0xff]
        %v622 = vld [vmem:[%s613 + $0x40] sm:$0xff]
        %v623 = vld [vmem:[%s613 + $0x48] sm:$0xff]
        %v624 = vld [vmem:[%s613 + $0x50] sm:$0xff]
        %v625 = vld [vmem:[%s613 + $0x58] sm:$0xff]
        %v626 = vld [vmem:[%s613 + $0x60] sm:$0xff]
        %v627 = vld [vmem:[%s613 + $0x68] sm:$0xff]
        %v628 = vld [vmem:[%s613 + $0x70] sm:$0xff]
        %v629 = vld [vmem:[%s613 + $0x78] sm:$0xff]
        %v630 = vld [vmem:[%s613 + $0x80] sm:$0xff]
        %v631 = vld [vmem:[%s613 + $0x88] sm:$0xff]
        %v632 = vld [vmem:[%s613 + $0x90] sm:$0xff]
        %v633 = vld [vmem:[%s613 + $0x98] sm:$0xff]
        %v634 = vld [vmem:[%s613 + $0xa0] sm:$0xff]
        %v635 = vld [vmem:[%s613 + $0xa8] sm:$0xff]
        %v636 = vld [vmem:[%s613 + $0xb0] sm:$0xff]
        %v637 = vld [vmem:[%s613 + $0xb8] sm:$0xff]
        %v638 = vld [vmem:[%s613 + $0xc0] sm:$0xff]
        %v639 = vld [vmem:[%s613 + $0xc8] sm:$0xff]
        %v640 = vld [vmem:[%s613 + $0xd0] sm:$0xff]
        %v641 = vld [vmem:[%s613 + $0xd8] sm:$0xff]
        %v642 = vld [vmem:[%s613 + $0xe0] sm:$0xff]
        %v643 = vld [vmem:[%s613 + $0xe8] sm:$0xff]
        %v644 = vld [vmem:[%s613 + $0xf0] sm:$0xff]
        %v645 = vld [vmem:[%s613 + $0xf8] sm:$0xff]
        %v646 = vld [vmem:[%s613 + $0x100] sm:$0xff]
        %v647 = vld [vmem:[%s613 + $0x108] sm:$0xff]
        %v648 = vld [vmem:[%s613 + $0x110] sm:$0xff]
        %v649 = vld [vmem:[%s613 + $0x118] sm:$0xff]
        %v650 = vld [vmem:[%s613 + $0x120] sm:$0xff]
        %v651 = vld [vmem:[%s613 + $0x128] sm:$0xff]
        %v652 = vld [vmem:[%s613 + $0x130] sm:$0xff]
        %v653 = vld [vmem:[%s613 + $0x138] sm:$0xff]
        %v654 = vld [vmem:[%s613 + $0x140] sm:$0xff]
        %v655 = vld [vmem:[%s613 + $0x148] sm:$0xff]
        %v656 = vld [vmem:[%s613 + $0x150] sm:$0xff]
        %v657 = vld [vmem:[%s613 + $0x158] sm:$0xff]
        %v658 = vld [vmem:[%s613 + $0x160] sm:$0xff]
        %v659 = vld [vmem:[%s613 + $0x168] sm:$0xff]
        %v660 = vld [vmem:[%s613 + $0x170] sm:$0xff]
        %v661 = vld [vmem:[%s613 + $0x178] sm:$0xff]
        %s662 = scalar_lea.vmem %s4, 2
        %v663 = vld [vmem:[%s662] sm:$0x1]
        %v666 = vrot.slane %v611, 7
        %v667 = vrot.slane %v612, 7
        %v668 = vsel %vm439, %v666, %v667
        %v671 = vsel %vm439, 0.0, %v666
        %v672 = vrot.slane %v611, 1
        %v673 = vrot.slane %v612, 1
        %v674 = vsel %vm446, %v672, %v673
        %v677 = vsel %vm446, %v673, 0.0
        %v679 = vlaneseq
        %v680 = vshrl.u32 %v679, 7
        %v681 = vsub.s32 0, %v680
        %v682 = vrot.slane %v663, %v681
        %684 = vmatprep.subr.mxu0 0.0
        %685 = vmatpush1.msra.mxu0 %v614
        %686 = vmatprep.subr.mxu0 0.0
        %687 = vmatpush1.msra.mxu0 %v615
        %688 = vmatprep.subr.mxu0 0.0
        %689 = vmatpush1.msra.mxu0 %v616
        %690 = vmatprep.subr.mxu0 0.0
        %691 = vmatpush1.msra.mxu0 %v617
        %692 = vmatprep.subr.mxu0 0.0
        %693 = vmatpush1.msra.mxu0 %v618
        %694 = vmatprep.subr.mxu0 0.0
        %695 = vmatpush1.msra.mxu0 %v619
        %696 = vmatprep.subr.mxu0 0.0
        %697 = vmatpush1.msra.mxu0 %v620
        %698 = vmatprep.subr.mxu0 0.0
        %699 = vmatpush1.msra.mxu0 %v621
        %700 = vmatprep.subr.mxu0 0.0
        %701 = vmatpush1.msra.mxu0 %v622
        %702 = vmatprep.subr.mxu0 0.0
        %703 = vmatpush1.msra.mxu0 %v623
        %704 = vmatprep.subr.mxu0 0.0
        %705 = vmatpush1.msra.mxu0 %v624
        %706 = vmatprep.subr.mxu0 0.0
        %707 = vmatpush1.msra.mxu0 %v625
        %708 = vmatprep.subr.mxu0 0.0
        %709 = vmatpush1.msra.mxu0 %v626
        %710 = vmatprep.subr.mxu0 0.0
        %711 = vmatpush1.msra.mxu0 %v627
        %712 = vmatprep.subr.mxu0 0.0
        %713 = vmatpush1.msra.mxu0 %v628
        %714 = vmatprep.subr.mxu0 0.0
        %715 = vmatpush1.msra.mxu0 %v629
        %716 = vmatprep.subr.mxu0 0.0
        %717 = vmatpush1.msra.mxu0 %v630
        %718 = vmatprep.subr.mxu0 0.0
        %719 = vmatpush1.msra.mxu0 %v631
        %720 = vmatprep.subr.mxu0 0.0
        %721 = vmatpush1.msra.mxu0 %v632
        %722 = vmatprep.subr.mxu0 0.0
        %723 = vmatpush1.msra.mxu0 %v633
        %724 = vmatprep.subr.mxu0 0.0
        %725 = vmatpush1.msra.mxu0 %v634
        %726 = vmatprep.subr.mxu0 0.0
        %727 = vmatpush1.msra.mxu0 %v635
        %728 = vmatprep.subr.mxu0 0.0
        %729 = vmatpush1.msra.mxu0 %v636
        %730 = vmatprep.subr.mxu0 0.0
        %731 = vmatpush1.msra.mxu0 %v637
        %732 = vmatprep.subr.mxu0 0.0
        %733 = vmatpush1.msra.mxu0 %v638
        %734 = vmatprep.subr.mxu0 0.0
        %735 = vmatpush1.msra.mxu0 %v639
        %736 = vmatprep.subr.mxu0 0.0
        %737 = vmatpush1.msra.mxu0 %v640
        %738 = vmatprep.subr.mxu0 0.0
        %739 = vmatpush1.msra.mxu0 %v641
        %740 = vmatprep.subr.mxu0 0.0
        %741 = vmatpush1.msra.mxu0 %v642
        %742 = vmatprep.subr.mxu0 0.0
        %743 = vmatpush1.msra.mxu0 %v643
        %744 = vmatprep.subr.mxu0 0.0
        %745 = vmatpush1.msra.mxu0 %v644
        %746 = vmatprep.subr.mxu0 0.0
        %747 = vmatpush1.msra.mxu0 %v645
        %748 = vmatprep.mubr.f32.mxu0 %v611
        %749 = vmatmul.mubr.f32.gmra.mrb[0].mxu0 %v671
        %v750 = vpop.f32.mrb[0].mxu0
        %v751 = vadd.f32 %v682, %v750
        %v752 = vpop.f32.mrb[0].mxu0
        %753 = vmatprep.mubr.f32.mxu0 %v612
        %754 = vmatmul.mubr.f32.gmra.mrb[0].mxu0 %v668
        %v755 = vpop.f32.mrb[0].mxu0
        %v756 = vadd.f32 %v682, %v755
        %v757 = vpop.f32.mrb[0].mxu0
        %758 = vdwg.mxu0
        %759 = vmatprep.subr.mxu0 0.0
        %760 = vmatpush1.msra.mxu0 %v646
        %761 = vmatprep.subr.mxu0 0.0
        %762 = vmatpush1.msra.mxu0 %v647
        %763 = vmatprep.subr.mxu0 0.0
        %764 = vmatpush1.msra.mxu0 %v648
        %765 = vmatprep.subr.mxu0 0.0
        %766 = vmatpush1.msra.mxu0 %v649
        %767 = vmatprep.subr.mxu0 0.0
        %768 = vmatpush1.msra.mxu0 %v650
        %769 = vmatprep.subr.mxu0 0.0
        %770 = vmatpush1.msra.mxu0 %v651
        %771 = vmatprep.subr.mxu0 0.0
        %772 = vmatpush1.msra.mxu0 %v652
        %773 = vmatprep.subr.mxu0 0.0
        %774 = vmatpush1.msra.mxu0 %v653
        %775 = vmatprep.subr.mxu0 0.0
        %776 = vmatpush1.msra.mxu0 %v654
        %777 = vmatprep.subr.mxu0 0.0
        %778 = vmatpush1.msra.mxu0 %v655
        %779 = vmatprep.subr.mxu0 0.0
        %780 = vmatpush1.msra.mxu0 %v656
        %781 = vmatprep.subr.mxu0 0.0
        %782 = vmatpush1.msra.mxu0 %v657
        %783 = vmatprep.subr.mxu0 0.0
        %784 = vmatpush1.msra.mxu0 %v658
        %785 = vmatprep.subr.mxu0 0.0
        %786 = vmatpush1.msra.mxu0 %v659
        %787 = vmatprep.subr.mxu0 0.0
        %788 = vmatpush1.msra.mxu0 %v660
        %789 = vmatprep.subr.mxu0 0.0
        %790 = vmatpush1.msra.mxu0 %v661
        %791 = vmatprep.subr.mxu0 0.0
        %792 = vmatpush1.msra.mxu0 0.0
        %793 = vmatprep.subr.mxu0 0.0
        %794 = vmatpush1.msra.mxu0 0.0
        %795 = vmatprep.subr.mxu0 0.0
        %796 = vmatpush1.msra.mxu0 0.0
        %797 = vmatprep.subr.mxu0 0.0
        %798 = vmatpush1.msra.mxu0 0.0
        %799 = vmatprep.subr.mxu0 0.0
        %800 = vmatpush1.msra.mxu0 0.0
        %801 = vmatprep.subr.mxu0 0.0
        %802 = vmatpush1.msra.mxu0 0.0
        %803 = vmatprep.subr.mxu0 0.0
        %804 = vmatpush1.msra.mxu0 0.0
        %805 = vmatprep.subr.mxu0 0.0
        %806 = vmatpush1.msra.mxu0 0.0
        %807 = vmatprep.subr.mxu0 0.0
        %808 = vmatpush1.msra.mxu0 0.0
        %809 = vmatprep.subr.mxu0 0.0
        %810 = vmatpush1.msra.mxu0 0.0
        %811 = vmatprep.subr.mxu0 0.0
        %812 = vmatpush1.msra.mxu0 0.0
        %813 = vmatprep.subr.mxu0 0.0
        %814 = vmatpush1.msra.mxu0 0.0
        %815 = vmatprep.subr.mxu0 0.0
        %816 = vmatpush1.msra.mxu0 0.0
        %817 = vmatprep.subr.mxu0 0.0
        %818 = vmatpush1.msra.mxu0 0.0
        %819 = vmatprep.subr.mxu0 0.0
        %820 = vmatpush1.msra.mxu0 0.0
        %821 = vmatprep.subr.mxu0 0.0
        %822 = vmatpush1.msra.mxu0 0.0
        %823 = vmatprep.mubr.f32.mxu0 0.0
        %824 = vmatmul.mubr.f32.gmra.mrb[0].mxu0 %v674
        %v825 = vpop.f32.mrb[0].mxu0
        %v826 = vadd.f32 %v751, %v825
        %v827 = vpop.f32.mrb[0].mxu0
        %828 = vmatprep.mubr.f32.mxu0 0.0
        %829 = vmatmul.mubr.f32.gmra.mrb[0].mxu0 %v677
        %v830 = vpop.f32.mrb[0].mxu0
        %v831 = vadd.f32 %v756, %v830
        %v832 = vpop.f32.mrb[0].mxu0
        %833 = vdwg.mxu0
        %v834 = vmax.f32 %v826, 0.0
        %v835 = vmax.f32 %v831, 0.0
        %v836 = vadd.f32 %v834, %v611
        %v837 = vadd.f32 %v835, %v612
        %s838 = scalar_lea.vmem [#allocation7], 768
        %v839 = vld [vmem:[%s838] sm:$0xff]
        %v840 = vld [vmem:[%s838 + $0x8] sm:$0xff]
        %v841 = vld [vmem:[%s838 + $0x10] sm:$0xff]
        %v842 = vld [vmem:[%s838 + $0x18] sm:$0xff]
        %v843 = vld [vmem:[%s838 + $0x20] sm:$0xff]
        %v844 = vld [vmem:[%s838 + $0x28] sm:$0xff]
        %v845 = vld [vmem:[%s838 + $0x30] sm:$0xff]
        %v846 = vld [vmem:[%s838 + $0x38] sm:$0xff]
        %v847 = vld [vmem:[%s838 + $0x40] sm:$0xff]
        %v848 = vld [vmem:[%s838 + $0x48] sm:$0xff]
        %v849 = vld [vmem:[%s838 + $0x50] sm:$0xff]
        %v850 = vld [vmem:[%s838 + $0x58] sm:$0xff]
        %v851 = vld [vmem:[%s838 + $0x60] sm:$0xff]
        %v852 = vld [vmem:[%s838 + $0x68] sm:$0xff]
        %v853 = vld [vmem:[%s838 + $0x70] sm:$0xff]
        %v854 = vld [vmem:[%s838 + $0x78] sm:$0xff]
        %v855 = vld [vmem:[%s838 + $0x80] sm:$0xff]
        %v856 = vld [vmem:[%s838 + $0x88] sm:$0xff]
        %v857 = vld [vmem:[%s838 + $0x90] sm:$0xff]
        %v858 = vld [vmem:[%s838 + $0x98] sm:$0xff]
        %v859 = vld [vmem:[%s838 + $0xa0] sm:$0xff]
        %v860 = vld [vmem:[%s838 + $0xa8] sm:$0xff]
        %v861 = vld [vmem:[%s838 + $0xb0] sm:$0xff]
        %v862 = vld [vmem:[%s838 + $0xb8] sm:$0xff]
        %v863 = vld [vmem:[%s838 + $0xc0] sm:$0xff]
        %v864 = vld [vmem:[%s838 + $0xc8] sm:$0xff]
        %v865 = vld [vmem:[%s838 + $0xd0] sm:$0xff]
        %v866 = vld [vmem:[%s838 + $0xd8] sm:$0xff]
        %v867 = vld [vmem:[%s838 + $0xe0] sm:$0xff]
        %v868 = vld [vmem:[%s838 + $0xe8] sm:$0xff]
        %v869 = vld [vmem:[%s838 + $0xf0] sm:$0xff]
        %v870 = vld [vmem:[%s838 + $0xf8] sm:$0xff]
        %v871 = vld [vmem:[%s838 + $0x100] sm:$0xff]
        %v872 = vld [vmem:[%s838 + $0x108] sm:$0xff]
        %v873 = vld [vmem:[%s838 + $0x110] sm:$0xff]
        %v874 = vld [vmem:[%s838 + $0x118] sm:$0xff]
        %v875 = vld [vmem:[%s838 + $0x120] sm:$0xff]
        %v876 = vld [vmem:[%s838 + $0x128] sm:$0xff]
        %v877 = vld [vmem:[%s838 + $0x130] sm:$0xff]
        %v878 = vld [vmem:[%s838 + $0x138] sm:$0xff]
        %v879 = vld [vmem:[%s838 + $0x140] sm:$0xff]
        %v880 = vld [vmem:[%s838 + $0x148] sm:$0xff]
        %v881 = vld [vmem:[%s838 + $0x150] sm:$0xff]
        %v882 = vld [vmem:[%s838 + $0x158] sm:$0xff]
        %v883 = vld [vmem:[%s838 + $0x160] sm:$0xff]
        %v884 = vld [vmem:[%s838 + $0x168] sm:$0xff]
        %v885 = vld [vmem:[%s838 + $0x170] sm:$0xff]
        %v886 = vld [vmem:[%s838 + $0x178] sm:$0xff]
        %s887 = scalar_lea.vmem %s4, 3
        %v888 = vld [vmem:[%s887] sm:$0x1]
        %v891 = vrot.slane %v836, 7
        %v892 = vrot.slane %v837, 7
        %v893 = vsel %vm439, %v891, %v892
        %v896 = vsel %vm439, 0.0, %v891
        %v897 = vrot.slane %v836, 1
        %v898 = vrot.slane %v837, 1
        %v899 = vsel %vm446, %v897, %v898
        %v902 = vsel %vm446, %v898, 0.0
        %v904 = vlaneseq
        %v905 = vshrl.u32 %v904, 7
        %v906 = vsub.s32 0, %v905
        %v907 = vrot.slane %v888, %v906
        %909 = vmatprep.subr.mxu0 0.0
        %910 = vmatpush1.msra.mxu0 %v839
        %911 = vmatprep.subr.mxu0 0.0
        %912 = vmatpush1.msra.mxu0 %v840
        %913 = vmatprep.subr.mxu0 0.0
        %914 = vmatpush1.msra.mxu0 %v841
        %915 = vmatprep.subr.mxu0 0.0
        %916 = vmatpush1.msra.mxu0 %v842
        %917 = vmatprep.subr.mxu0 0.0
        %918 = vmatpush1.msra.mxu0 %v843
        %919 = vmatprep.subr.mxu0 0.0
        %920 = vmatpush1.msra.mxu0 %v844
        %921 = vmatprep.subr.mxu0 0.0
        %922 = vmatpush1.msra.mxu0 %v845
        %923 = vmatprep.subr.mxu0 0.0
        %924 = vmatpush1.msra.mxu0 %v846
        %925 = vmatprep.subr.mxu0 0.0
        %926 = vmatpush1.msra.mxu0 %v847
        %927 = vmatprep.subr.mxu0 0.0
        %928 = vmatpush1.msra.mxu0 %v848
        %929 = vmatprep.subr.mxu0 0.0
        %930 = vmatpush1.msra.mxu0 %v849
        %931 = vmatprep.subr.mxu0 0.0
        %932 = vmatpush1.msra.mxu0 %v850
        %933 = vmatprep.subr.mxu0 0.0
        %934 = vmatpush1.msra.mxu0 %v851
        %935 = vmatprep.subr.mxu0 0.0
        %936 = vmatpush1.msra.mxu0 %v852
        %937 = vmatprep.subr.mxu0 0.0
        %938 = vmatpush1.msra.mxu0 %v853
        %939 = vmatprep.subr.mxu0 0.0
        %940 = vmatpush1.msra.mxu0 %v854
        %941 = vmatprep.subr.mxu0 0.0
        %942 = vmatpush1.msra.mxu0 %v855
        %943 = vmatprep.subr.mxu0 0.0
        %944 = vmatpush1.msra.mxu0 %v856
        %945 = vmatprep.subr.mxu0 0.0
        %946 = vmatpush1.msra.mxu0 %v857
        %947 = vmatprep.subr.mxu0 0.0
        %948 = vmatpush1.msra.mxu0 %v858
        %949 = vmatprep.subr.mxu0 0.0
        %950 = vmatpush1.msra.mxu0 %v859
        %951 = vmatprep.subr.mxu0 0.0
        %952 = vmatpush1.msra.mxu0 %v860
        %953 = vmatprep.subr.mxu0 0.0
        %954 = vmatpush1.msra.mxu0 %v861
        %955 = vmatprep.subr.mxu0 0.0
        %956 = vmatpush1.msra.mxu0 %v862
        %957 = vmatprep.subr.mxu0 0.0
        %958 = vmatpush1.msra.mxu0 %v863
        %959 = vmatprep.subr.mxu0 0.0
        %960 = vmatpush1.msra.mxu0 %v864
        %961 = vmatprep.subr.mxu0 0.0
        %962 = vmatpush1.msra.mxu0 %v865
        %963 = vmatprep.subr.mxu0 0.0
        %964 = vmatpush1.msra.mxu0 %v866
        %965 = vmatprep.subr.mxu0 0.0
        %966 = vmatpush1.msra.mxu0 %v867
        %967 = vmatprep.subr.mxu0 0.0
        %968 = vmatpush1.msra.mxu0 %v868
        %969 = vmatprep.subr.mxu0 0.0
        %970 = vmatpush1.msra.mxu0 %v869
        %971 = vmatprep.subr.mxu0 0.0
        %972 = vmatpush1.msra.mxu0 %v870
        %973 = vmatprep.mubr.f32.mxu0 %v836
        %974 = vmatmul.mubr.f32.gmra.mrb[0].mxu0 %v896
        %v975 = vpop.f32.mrb[0].mxu0
        %v976 = vadd.f32 %v907, %v975
        %v977 = vpop.f32.mrb[0].mxu0
        %978 = vmatprep.mubr.f32.mxu0 %v837
        %979 = vmatmul.mubr.f32.gmra.mrb[0].mxu0 %v893
        %v980 = vpop.f32.mrb[0].mxu0
        %v981 = vadd.f32 %v907, %v980
        %v982 = vpop.f32.mrb[0].mxu0
        %983 = vdwg.mxu0
        %984 = vmatprep.subr.mxu0 0.0
        %985 = vmatpush1.msra.mxu0 %v871
        %986 = vmatprep.subr.mxu0 0.0
        %987 = vmatpush1.msra.mxu0 %v872
        %988 = vmatprep.subr.mxu0 0.0
        %989 = vmatpush1.msra.mxu0 %v873
        %990 = vmatprep.subr.mxu0 0.0
        %991 = vmatpush1.msra.mxu0 %v874
        %992 = vmatprep.subr.mxu0 0.0
        %993 = vmatpush1.msra.mxu0 %v875
        %994 = vmatprep.subr.mxu0 0.0
        %995 = vmatpush1.msra.mxu0 %v876
        %996 = vmatprep.subr.mxu0 0.0
        %997 = vmatpush1.msra.mxu0 %v877
        %998 = vmatprep.subr.mxu0 0.0
        %999 = vmatpush1.msra.mxu0 %v878
        %1000 = vmatprep.subr.mxu0 0.0
        %1001 = vmatpush1.msra.mxu0 %v879
        %1002 = vmatprep.subr.mxu0 0.0
        %1003 = vmatpush1.msra.mxu0 %v880
        %1004 = vmatprep.subr.mxu0 0.0
        %1005 = vmatpush1.msra.mxu0 %v881
        %1006 = vmatprep.subr.mxu0 0.0
        %1007 = vmatpush1.msra.mxu0 %v882
        %1008 = vmatprep.subr.mxu0 0.0
        %1009 = vmatpush1.msra.mxu0 %v883
        %1010 = vmatprep.subr.mxu0 0.0
        %1011 = vmatpush1.msra.mxu0 %v884
        %1012 = vmatprep.subr.mxu0 0.0
        %1013 = vmatpush1.msra.mxu0 %v885
        %1014 = vmatprep.subr.mxu0 0.0
        %1015 = vmatpush1.msra.mxu0 %v886
        %1016 = vmatprep.subr.mxu0 0.0
        %1017 = vmatpush1.msra.mxu0 0.0
        %1018 = vmatprep.subr.mxu0 0.0
        %1019 = vmatpush1.msra.mxu0 0.0
        %1020 = vmatprep.subr.mxu0 0.0
        %1021 = vmatpush1.msra.mxu0 0.0
        %1022 = vmatprep.subr.mxu0 0.0
        %1023 = vmatpush1.msra.mxu0 0.0
        %1024 = vmatprep.subr.mxu0 0.0
        %1025 = vmatpush1.msra.mxu0 0.0
        %1026 = vmatprep.subr.mxu0 0.0
        %1027 = vmatpush1.msra.mxu0 0.0
        %1028 = vmatprep.subr.mxu0 0.0
        %1029 = vmatpush1.msra.mxu0 0.0
        %1030 = vmatprep.subr.mxu0 0.0
        %1031 = vmatpush1.msra.mxu0 0.0
        %1032 = vmatprep.subr.mxu0 0.0
        %1033 = vmatpush1.msra.mxu0 0.0
        %1034 = vmatprep.subr.mxu0 0.0
        %1035 = vmatpush1.msra.mxu0 0.0
        %1036 = vmatprep.subr.mxu0 0.0
        %1037 = vmatpush1.msra.mxu0 0.0
        %1038 = vmatprep.subr.mxu0 0.0
        %1039 = vmatpush1.msra.mxu0 0.0
        %1040 = vmatprep.subr.mxu0 0.0
        %1041 = vmatpush1.msra.mxu0 0.0
        %1042 = vmatprep.subr.mxu0 0.0
        %1043 = vmatpush1.msra.mxu0 0.0
        %1044 = vmatprep.subr.mxu0 0.0
        %1045 = vmatpush1.msra.mxu0 0.0
        %1046 = vmatprep.subr.mxu0 0.0
        %1047 = vmatpush1.msra.mxu0 0.0
        %1048 = vmatprep.mubr.f32.mxu0 0.0
        %1049 = vmatmul.mubr.f32.gmra.mrb[0].mxu0 %v899
        %v1050 = vpop.f32.mrb[0].mxu0
        %v1051 = vadd.f32 %v976, %v1050
        %v1052 = vpop.f32.mrb[0].mxu0
        %1053 = vmatprep.mubr.f32.mxu0 0.0
        %1054 = vmatmul.mubr.f32.gmra.mrb[0].mxu0 %v902
        %v1055 = vpop.f32.mrb[0].mxu0
        %v1056 = vadd.f32 %v981, %v1055
        %v1057 = vpop.f32.mrb[0].mxu0
        %1058 = vdwg.mxu0
        %v1059 = vmax.f32 %v1051, 0.0
        %v1060 = vmax.f32 %v1056, 0.0
        %v1061 = vadd.f32 %v1059, %v836
        %v1062 = vadd.f32 %v1060, %v837
        %s1063 = scalar_lea.vmem [#allocation7], 1152
        %v1064 = vld [vmem:[%s1063] sm:$0xff]
        %v1065 = vld [vmem:[%s1063 + $0x8] sm:$0xff]
        %v1066 = vld [vmem:[%s1063 + $0x10] sm:$0xff]
        %v1067 = vld [vmem:[%s1063 + $0x18] sm:$0xff]
        %v1068 = vld [vmem:[%s1063 + $0x20] sm:$0xff]
        %v1069 = vld [vmem:[%s1063 + $0x28] sm:$0xff]
        %v1070 = vld [vmem:[%s1063 + $0x30] sm:$0xff]
        %v1071 = vld [vmem:[%s1063 + $0x38] sm:$0xff]
        %v1072 = vld [vmem:[%s1063 + $0x40] sm:$0xff]
        %v1073 = vld [vmem:[%s1063 + $0x48] sm:$0xff]
        %v1074 = vld [vmem:[%s1063 + $0x50] sm:$0xff]
        %v1075 = vld [vmem:[%s1063 + $0x58] sm:$0xff]
        %v1076 = vld [vmem:[%s1063 + $0x60] sm:$0xff]
        %v1077 = vld [vmem:[%s1063 + $0x68] sm:$0xff]
        %v1078 = vld [vmem:[%s1063 + $0x70] sm:$0xff]
        %v1079 = vld [vmem:[%s1063 + $0x78] sm:$0xff]
        %v1080 = vld [vmem:[%s1063 + $0x80] sm:$0xff]
        %v1081 = vld [vmem:[%s1063 + $0x88] sm:$0xff]
        %v1082 = vld [vmem:[%s1063 + $0x90] sm:$0xff]
        %v1083 = vld [vmem:[%s1063 + $0x98] sm:$0xff]
        %v1084 = vld [vmem:[%s1063 + $0xa0] sm:$0xff]
        %v1085 = vld [vmem:[%s1063 + $0xa8] sm:$0xff]
        %v1086 = vld [vmem:[%s1063 + $0xb0] sm:$0xff]
        %v1087 = vld [vmem:[%s1063 + $0xb8] sm:$0xff]
        %v1088 = vld [vmem:[%s1063 + $0xc0] sm:$0xff]
        %v1089 = vld [vmem:[%s1063 + $0xc8] sm:$0xff]
        %v1090 = vld [vmem:[%s1063 + $0xd0] sm:$0xff]
        %v1091 = vld [vmem:[%s1063 + $0xd8] sm:$0xff]
        %v1092 = vld [vmem:[%s1063 + $0xe0] sm:$0xff]
        %v1093 = vld [vmem:[%s1063 + $0xe8] sm:$0xff]
        %v1094 = vld [vmem:[%s1063 + $0xf0] sm:$0xff]
        %v1095 = vld [vmem:[%s1063 + $0xf8] sm:$0xff]
        %v1096 = vld [vmem:[%s1063 + $0x100] sm:$0xff]
        %v1097 = vld [vmem:[%s1063 + $0x108] sm:$0xff]
        %v1098 = vld [vmem:[%s1063 + $0x110] sm:$0xff]
        %v1099 = vld [vmem:[%s1063 + $0x118] sm:$0xff]
        %v1100 = vld [vmem:[%s1063 + $0x120] sm:$0xff]
        %v1101 = vld [vmem:[%s1063 + $0x128] sm:$0xff]
        %v1102 = vld [vmem:[%s1063 + $0x130] sm:$0xff]
        %v1103 = vld [vmem:[%s1063 + $0x138] sm:$0xff]
        %v1104 = vld [vmem:[%s1063 + $0x140] sm:$0xff]
        %v1105 = vld [vmem:[%s1063 + $0x148] sm:$0xff]
        %v1106 = vld [vmem:[%s1063 + $0x150] sm:$0xff]
        %v1107 = vld [vmem:[%s1063 + $0x158] sm:$0xff]
        %v1108 = vld [vmem:[%s1063 + $0x160] sm:$0xff]
        %v1109 = vld [vmem:[%s1063 + $0x168] sm:$0xff]
        %v1110 = vld [vmem:[%s1063 + $0x170] sm:$0xff]
        %v1111 = vld [vmem:[%s1063 + $0x178] sm:$0xff]
        %s1112 = scalar_lea.vmem %s4, 4
        %v1113 = vld [vmem:[%s1112] sm:$0x1]
        %v1116 = vrot.slane %v1061, 7
        %v1117 = vrot.slane %v1062, 7
        %v1118 = vsel %vm439, %v1116, %v1117
        %v1121 = vsel %vm439, 0.0, %v1116
        %v1122 = vrot.slane %v1061, 1
        %v1123 = vrot.slane %v1062, 1
        %v1124 = vsel %vm446, %v1122, %v1123
        %v1127 = vsel %vm446, %v1123, 0.0
        %v1129 = vlaneseq
        %v1130 = vshrl.u32 %v1129, 7
        %v1131 = vsub.s32 0, %v1130
        %v1132 = vrot.slane %v1113, %v1131
        %1134 = vmatprep.subr.mxu0 0.0
        %1135 = vmatpush1.msra.mxu0 %v1064
        %1136 = vmatprep.subr.mxu0 0.0
        %1137 = vmatpush1.msra.mxu0 %v1065
        %1138 = vmatprep.subr.mxu0 0.0
        %1139 = vmatpush1.msra.mxu0 %v1066
        %1140 = vmatprep.subr.mxu0 0.0
        %1141 = vmatpush1.msra.mxu0 %v1067
        %1142 = vmatprep.subr.mxu0 0.0
        %1143 = vmatpush1.msra.mxu0 %v1068
        %1144 = vmatprep.subr.mxu0 0.0
        %1145 = vmatpush1.msra.mxu0 %v1069
        %1146 = vmatprep.subr.mxu0 0.0
        %1147 = vmatpush1.msra.mxu0 %v1070
        %1148 = vmatprep.subr.mxu0 0.0
        %1149 = vmatpush1.msra.mxu0 %v1071
        %1150 = vmatprep.subr.mxu0 0.0
        %1151 = vmatpush1.msra.mxu0 %v1072
        %1152 = vmatprep.subr.mxu0 0.0
        %1153 = vmatpush1.msra.mxu0 %v1073
        %1154 = vmatprep.subr.mxu0 0.0
        %1155 = vmatpush1.msra.mxu0 %v1074
        %1156 = vmatprep.subr.mxu0 0.0
        %1157 = vmatpush1.msra.mxu0 %v1075
        %1158 = vmatprep.subr.mxu0 0.0
        %1159 = vmatpush1.msra.mxu0 %v1076
        %1160 = vmatprep.subr.mxu0 0.0
        %1161 = vmatpush1.msra.mxu0 %v1077
        %1162 = vmatprep.subr.mxu0 0.0
        %1163 = vmatpush1.msra.mxu0 %v1078
        %1164 = vmatprep.subr.mxu0 0.0
        %1165 = vmatpush1.msra.mxu0 %v1079
        %1166 = vmatprep.subr.mxu0 0.0
        %1167 = vmatpush1.msra.mxu0 %v1080
        %1168 = vmatprep.subr.mxu0 0.0
        %1169 = vmatpush1.msra.mxu0 %v1081
        %1170 = vmatprep.subr.mxu0 0.0
        %1171 = vmatpush1.msra.mxu0 %v1082
        %1172 = vmatprep.subr.mxu0 0.0
        %1173 = vmatpush1.msra.mxu0 %v1083
        %1174 = vmatprep.subr.mxu0 0.0
        %1175 = vmatpush1.msra.mxu0 %v1084
        %1176 = vmatprep.subr.mxu0 0.0
        %1177 = vmatpush1.msra.mxu0 %v1085
        %1178 = vmatprep.subr.mxu0 0.0
        %1179 = vmatpush1.msra.mxu0 %v1086
        %1180 = vmatprep.subr.mxu0 0.0
        %1181 = vmatpush1.msra.mxu0 %v1087
        %1182 = vmatprep.subr.mxu0 0.0
        %1183 = vmatpush1.msra.mxu0 %v1088
        %1184 = vmatprep.subr.mxu0 0.0
        %1185 = vmatpush1.msra.mxu0 %v1089
        %1186 = vmatprep.subr.mxu0 0.0
        %1187 = vmatpush1.msra.mxu0 %v1090
        %1188 = vmatprep.subr.mxu0 0.0
        %1189 = vmatpush1.msra.mxu0 %v1091
        %1190 = vmatprep.subr.mxu0 0.0
        %1191 = vmatpush1.msra.mxu0 %v1092
        %1192 = vmatprep.subr.mxu0 0.0
        %1193 = vmatpush1.msra.mxu0 %v1093
        %1194 = vmatprep.subr.mxu0 0.0
        %1195 = vmatpush1.msra.mxu0 %v1094
        %1196 = vmatprep.subr.mxu0 0.0
        %1197 = vmatpush1.msra.mxu0 %v1095
        %1198 = vmatprep.mubr.f32.mxu0 %v1061
        %1199 = vmatmul.mubr.f32.gmra.mrb[0].mxu0 %v1121
        %v1200 = vpop.f32.mrb[0].mxu0
        %v1201 = vadd.f32 %v1132, %v1200
        %v1202 = vpop.f32.mrb[0].mxu0
        %1203 = vmatprep.mubr.f32.mxu0 %v1062
        %1204 = vmatmul.mubr.f32.gmra.mrb[0].mxu0 %v1118
        %v1205 = vpop.f32.mrb[0].mxu0
        %v1206 = vadd.f32 %v1132, %v1205
        %v1207 = vpop.f32.mrb[0].mxu0
        %1208 = vdwg.mxu0
        %1209 = vmatprep.subr.mxu0 0.0
        %1210 = vmatpush1.msra.mxu0 %v1096
        %1211 = vmatprep.subr.mxu0 0.0
        %1212 = vmatpush1.msra.mxu0 %v1097
        %1213 = vmatprep.subr.mxu0 0.0
        %1214 = vmatpush1.msra.mxu0 %v1098
        %1215 = vmatprep.subr.mxu0 0.0
        %1216 = vmatpush1.msra.mxu0 %v1099
        %1217 = vmatprep.subr.mxu0 0.0
        %1218 = vmatpush1.msra.mxu0 %v1100
        %1219 = vmatprep.subr.mxu0 0.0
        %1220 = vmatpush1.msra.mxu0 %v1101
        %1221 = vmatprep.subr.mxu0 0.0
        %1222 = vmatpush1.msra.mxu0 %v1102
        %1223 = vmatprep.subr.mxu0 0.0
        %1224 = vmatpush1.msra.mxu0 %v1103
        %1225 = vmatprep.subr.mxu0 0.0
        %1226 = vmatpush1.msra.mxu0 %v1104
        %1227 = vmatprep.subr.mxu0 0.0
        %1228 = vmatpush1.msra.mxu0 %v1105
        %1229 = vmatprep.subr.mxu0 0.0
        %1230 = vmatpush1.msra.mxu0 %v1106
        %1231 = vmatprep.subr.mxu0 0.0
        %1232 = vmatpush1.msra.mxu0 %v1107
        %1233 = vmatprep.subr.mxu0 0.0
        %1234 = vmatpush1.msra.mxu0 %v1108
        %1235 = vmatprep.subr.mxu0 0.0
        %1236 = vmatpush1.msra.mxu0 %v1109
        %1237 = vmatprep.subr.mxu0 0.0
        %1238 = vmatpush1.msra.mxu0 %v1110
        %1239 = vmatprep.subr.mxu0 0.0
        %1240 = vmatpush1.msra.mxu0 %v1111
        %1241 = vmatprep.subr.mxu0 0.0
        %1242 = vmatpush1.msra.mxu0 0.0
        %1243 = vmatprep.subr.mxu0 0.0
        %1244 = vmatpush1.msra.mxu0 0.0
        %1245 = vmatprep.subr.mxu0 0.0
        %1246 = vmatpush1.msra.mxu0 0.0
        %1247 = vmatprep.subr.mxu0 0.0
        %1248 = vmatpush1.msra.mxu0 0.0
        %1249 = vmatprep.subr.mxu0 0.0
        %1250 = vmatpush1.msra.mxu0 0.0
        %1251 = vmatprep.subr.mxu0 0.0
        %1252 = vmatpush1.msra.mxu0 0.0
        %1253 = vmatprep.subr.mxu0 0.0
        %1254 = vmatpush1.msra.mxu0 0.0
        %1255 = vmatprep.subr.mxu0 0.0
        %1256 = vmatpush1.msra.mxu0 0.0
        %1257 = vmatprep.subr.mxu0 0.0
        %1258 = vmatpush1.msra.mxu0 0.0
        %1259 = vmatprep.subr.mxu0 0.0
        %1260 = vmatpush1.msra.mxu0 0.0
        %1261 = vmatprep.subr.mxu0 0.0
        %1262 = vmatpush1.msra.mxu0 0.0
        %1263 = vmatprep.subr.mxu0 0.0
        %1264 = vmatpush1.msra.mxu0 0.0
        %1265 = vmatprep.subr.mxu0 0.0
        %1266 = vmatpush1.msra.mxu0 0.0
        %1267 = vmatprep.subr.mxu0 0.0
        %1268 = vmatpush1.msra.mxu0 0.0
        %1269 = vmatprep.subr.mxu0 0.0
        %1270 = vmatpush1.msra.mxu0 0.0
        %1271 = vmatprep.subr.mxu0 0.0
        %1272 = vmatpush1.msra.mxu0 0.0
        %1273 = vmatprep.mubr.f32.mxu0 0.0
        %1274 = vmatmul.mubr.f32.gmra.mrb[0].mxu0 %v1124
        %v1275 = vpop.f32.mrb[0].mxu0
        %v1276 = vadd.f32 %v1201, %v1275
        %v1277 = vpop.f32.mrb[0].mxu0
        %1278 = vmatprep.mubr.f32.mxu0 0.0
        %1279 = vmatmul.mubr.f32.gmra.mrb[0].mxu0 %v1127
        %v1280 = vpop.f32.mrb[0].mxu0
        %v1281 = vadd.f32 %v1206, %v1280
        %v1282 = vpop.f32.mrb[0].mxu0
        %1283 = vdwg.mxu0
        %v1284 = vmax.f32 %v1276, 0.0
        %v1285 = vmax.f32 %v1281, 0.0
        %v1286 = vadd.f32 %v1284, %v1061
        %v1287 = vadd.f32 %v1285, %v1062
        %v1288 = vld [vmem:[#allocation8] sm:$0xff]
        %v1289 = vld [vmem:[#allocation8 + $0x8] sm:$0xff]
        %v1290 = vld [vmem:[#allocation8 + $0x10] sm:$0xff]
        %v1291 = vld [vmem:[#allocation8 + $0x18] sm:$0xff]
        %v1292 = vld [vmem:[#allocation8 + $0x20] sm:$0xff]
        %v1293 = vld [vmem:[#allocation8 + $0x28] sm:$0xff]
        %v1294 = vld [vmem:[#allocation8 + $0x30] sm:$0xff]
        %v1295 = vld [vmem:[#allocation8 + $0x38] sm:$0xff]
        %v1296 = vld [vmem:[#allocation8 + $0x40] sm:$0xff]
        %v1297 = vld [vmem:[#allocation8 + $0x48] sm:$0xff]
        %v1298 = vld [vmem:[#allocation8 + $0x50] sm:$0xff]
        %v1299 = vld [vmem:[#allocation8 + $0x58] sm:$0xff]
        %v1300 = vld [vmem:[#allocation8 + $0x60] sm:$0xff]
        %v1301 = vld [vmem:[#allocation8 + $0x68] sm:$0xff]
        %v1302 = vld [vmem:[#allocation8 + $0x70] sm:$0xff]
        %v1303 = vld [vmem:[#allocation8 + $0x78] sm:$0xff]
        %s1304 = scalar_lea.vmem %s4, 5
        %v1305 = vld [vmem:[%s1304] sm:$0x1]
        %v1307 = vlaneseq
        %v1308 = vshrl.u32 %v1307, 7
        %v1309 = vsub.s32 0, %v1308
        %v1310 = vrot.slane %v1305, %v1309
        %1312 = vmatprep.subr.mxu0 0.0
        %1313 = vmatpush1.msra.mxu0 %v1288
        %1314 = vmatprep.subr.mxu0 0.0
        %1315 = vmatpush1.msra.mxu0 %v1289
        %1316 = vmatprep.subr.mxu0 0.0
        %1317 = vmatpush1.msra.mxu0 %v1290
        %1318 = vmatprep.subr.mxu0 0.0
        %1319 = vmatpush1.msra.mxu0 %v1291
        %1320 = vmatprep.subr.mxu0 0.0
        %1321 = vmatpush1.msra.mxu0 %v1292
        %1322 = vmatprep.subr.mxu0 0.0
        %1323 = vmatpush1.msra.mxu0 %v1293
        %1324 = vmatprep.subr.mxu0 0.0
        %1325 = vmatpush1.msra.mxu0 %v1294
        %1326 = vmatprep.subr.mxu0 0.0
        %1327 = vmatpush1.msra.mxu0 %v1295
        %1328 = vmatprep.subr.mxu0 0.0
        %1329 = vmatpush1.msra.mxu0 %v1296
        %1330 = vmatprep.subr.mxu0 0.0
        %1331 = vmatpush1.msra.mxu0 %v1297
        %1332 = vmatprep.subr.mxu0 0.0
        %1333 = vmatpush1.msra.mxu0 %v1298
        %1334 = vmatprep.subr.mxu0 0.0
        %1335 = vmatpush1.msra.mxu0 %v1299
        %1336 = vmatprep.subr.mxu0 0.0
        %1337 = vmatpush1.msra.mxu0 %v1300
        %1338 = vmatprep.subr.mxu0 0.0
        %1339 = vmatpush1.msra.mxu0 %v1301
        %1340 = vmatprep.subr.mxu0 0.0
        %1341 = vmatpush1.msra.mxu0 %v1302
        %1342 = vmatprep.subr.mxu0 0.0
        %1343 = vmatpush1.msra.mxu0 %v1303
        %1344 = vmatprep.subr.mxu0 0.0
        %1345 = vmatpush1.msra.mxu0 0.0
        %1346 = vmatprep.subr.mxu0 0.0
        %1347 = vmatpush1.msra.mxu0 0.0
        %1348 = vmatprep.subr.mxu0 0.0
        %1349 = vmatpush1.msra.mxu0 0.0
        %1350 = vmatprep.subr.mxu0 0.0
        %1351 = vmatpush1.msra.mxu0 0.0
        %1352 = vmatprep.subr.mxu0 0.0
        %1353 = vmatpush1.msra.mxu0 0.0
        %1354 = vmatprep.subr.mxu0 0.0
        %1355 = vmatpush1.msra.mxu0 0.0
        %1356 = vmatprep.subr.mxu0 0.0
        %1357 = vmatpush1.msra.mxu0 0.0
        %1358 = vmatprep.subr.mxu0 0.0
        %1359 = vmatpush1.msra.mxu0 0.0
        %1360 = vmatprep.subr.mxu0 0.0
        %1361 = vmatpush1.msra.mxu0 0.0
        %1362 = vmatprep.subr.mxu0 0.0
        %1363 = vmatpush1.msra.mxu0 0.0
        %1364 = vmatprep.subr.mxu0 0.0
        %1365 = vmatpush1.msra.mxu0 0.0
        %1366 = vmatprep.subr.mxu0 0.0
        %1367 = vmatpush1.msra.mxu0 0.0
        %1368 = vmatprep.subr.mxu0 0.0
        %1369 = vmatpush1.msra.mxu0 0.0
        %1370 = vmatprep.subr.mxu0 0.0
        %1371 = vmatpush1.msra.mxu0 0.0
        %1372 = vmatprep.subr.mxu0 0.0
        %1373 = vmatpush1.msra.mxu0 0.0
        %1374 = vmatprep.subr.mxu0 0.0
        %1375 = vmatpush1.msra.mxu0 0.0
        %1376 = vmatprep.mubr.f32.mxu0 0.0
        %1377 = vmatmul.mubr.f32.gmra.mrb[0].mxu0 %v1286
        %v1378 = vpop.f32.mrb[0].mxu0
        %v1379 = vadd.f32 %v1310, %v1378
        %v1380 = vpop.f32.mrb[0].mxu0
        %1381 = vmatprep.mubr.f32.mxu0 0.0
        %1382 = vmatmul.mubr.f32.gmra.mrb[0].mxu0 %v1287
        %v1383 = vpop.f32.mrb[0].mxu0
        %v1384 = vadd.f32 %v1310, %v1383
        %v1385 = vpop.f32.mrb[0].mxu0
        %1386 = vdwg.mxu0
        %v1387 = vadd.f32 %v1379, %v287
        %v1388 = vadd.f32 %v1384, %v288
        %1389 = vst [vmem:[%s286] sm:$0xff] %v1387
        %1390 = vst [vmem:[%s286 + $0x8] sm:$0xff] %v1388
        %s1391 = sand.u32 %s142, 1
        %s1392 = scalar_lea.sflag [#allocation4], %s1391
        %s1393 = sand.u32 %s142, 1
        %s1394 = smul.addr %s1393, 16
        %s1395 = scalar_lea.vmem [#allocation10], %s1394
        // Predicated region
        $region57: #{tpu_custom_call.1} parent=39 // pred_check
          %p1396 = pneg %p152
        $region58: #{tpu_custom_call.1} parent=39 // pred_check_branch
          %1398 = sbr.rel (%p1396) target = $region60
        $region59: #{tpu_custom_call.1} parent=39 // pred_region
          %s1400 = ssub.s32 256, 256
          %1401 = vsyncadd %s1392, %s1400
          %s1402 = smul.addr %s24, 2
          %s1403 = smul.addr %s1402, 128
          %s1404 = scalar_lea.hbm %s5, %s1403
          %s1405 = sshll.u32 %s1395, 4
          %s1406 = int_to_ptr.vmem [resolvable:$true] %s1405
          %1411 = dma.vmem_to_hbm [thread:$0]  %s1406, 256, %s1404, %s1392, 128, 128, 8
        $region60: #{tpu_custom_call.1} parent=39 // pred_fallthru
          _
      $region40: #{tpu_custom_call.1} parent=5 // pred_fallthru
        _
      %p1412 = scmp.le.s32.totalorder 2, %s19
      // Predicated region
      $region61: #{tpu_custom_call.1} parent=5 // pred_check
        %p1413 = pneg %p1412
      $region62: #{tpu_custom_call.1} parent=5 // pred_check_branch
        %1415 = sbr.rel (%p1413) target = $region64
      $region63: #{tpu_custom_call.1} parent=5 // pred_region
        %s1416 = ssub.s32 %s19, 2
        // Predicated region
        $region65: #{tpu_custom_call.1} parent=63 // pred_check
          %p1417 = pneg %p158
        $region66: #{tpu_custom_call.1} parent=63 // pred_check_branch
          %1419 = sbr.rel (%p1417) target = $region68
        $region67: #{tpu_custom_call.1} parent=63 // pred_region
          %s1420 = sand.u32 %s143, 1
          %s1421 = scalar_lea.sflag [#allocation4], %s1420
          %s1422 = sand.u32 %s143, 1
          %s1423 = smul.addr %s1422, 16
          %s1424 = scalar_lea.vmem [#allocation10], %s1423
          %1425 = dma.done %s1421, 256
        $region68: #{tpu_custom_call.1} parent=63 // pred_fallthru
          _
      $region64: #{tpu_custom_call.1} parent=5 // pred_fallthru
        _
    $region6: #{tpu_custom_call.1} parent=1 // loop_footer
      %s23 = sadd.s32 1, %s19
    $region7: #{tpu_custom_call.1} parent=1 // loop_footer_branch
      %18 = sbr.rel target = $region3
    $region8: #{tpu_custom_call.1} parent=1 // loop_exit
      _
    %1426 = vsyncpa [#allocation3], 1
    %s1427 = scalar_lea.sflag [#allocation3], 1
    %1428 = vsyncpa %s1427, 1
    %1429 = vsyncpa [#allocation6], 1
    %1430 = vsyncpa [#allocation9], 1
    %1431 = vsyncpa [#allocation4], 1
    %s1432 = scalar_lea.sflag [#allocation4], 1
    %1433 = vsyncpa %s1432, 1

</llo_original>
